<compile_context>
chip_gen: v5e
topology: v5e:2x2
jax: 0.10.0
libtpu: 0.0.40
codegen_flags: <defaults>
</compile_context>

<pallas_src>
import functools

import jax
import jax.numpy as jnp
from jax import lax
from jax.experimental import pallas as pl
from jax.experimental.pallas import tpu as pltpu


def _round_up(x, m):
    return (x + m - 1) // m * m


def _pick_h_tile(h, target):
    t = min(target, h)
    while h % t != 0:
        t -= 1
    return t


def _conv_bn_act_kernel(x_ref, w_ref, b_ref, o_ref, *, ht, wpp, kh, kw, ext):
    # x_ref: (1, ht + (kh-1) + 1, wpp, cin_p)  bf16 halo'd input tile
    # w_ref: (kw, kh*cin_p, cout_t)            bf16, BN scale folded in
    # b_ref: (1, cout_t)                       f32 folded BN bias
    # o_ref: (ht, wpp, cout_t)                 f32
    rows = x_ref.shape[1]
    cin_p = x_ref.shape[3]
    cout_t = o_ref.shape[-1]
    m = ht * wpp

    # Flatten (rows, wpp) -> flat rows; wpp is a multiple of 16 so this is a
    # layout-preserving reshape for bf16 (no relayout copy).
    x_full = x_ref[0].reshape(rows * wpp, cin_p)

    # Fold the KH taps into the contraction dim: each dy slab is a
    # sublane-aligned row slice (offset dy*wpp, multiple of 16), concatenated
    # along lanes -> patch (m+ext, kh*cin_p).  m+ext is a multiple of 16 so
    # the bf16 patch tiles cleanly; the ext slack rows only feed discarded
    # (padded-W) output columns.
    slabs = [x_full[dy * wpp: dy * wpp + m + ext] for dy in range(kh)]
    patch = jnp.concatenate(slabs, axis=-1)

    acc = None
    for dx in range(kw):
        y = jnp.dot(patch, w_ref[dx], preferred_element_type=jnp.float32)
        # dx handled as a static sublane shift of the f32 result (XLU work,
        # smaller than shifting the bf16 patch) instead of strided input
        # copies.  dx=0 is shift-free.
        contrib = y[dx: dx + m]
        acc = contrib if acc is None else acc + contrib

    z = acc + b_ref[...]           # folded BN bias
    out = z * jax.nn.sigmoid(z)    # Swish (EUP sigmoid + VPU mul)
    o_ref[...] = out.reshape(ht, wpp, cout_t).astype(o_ref.dtype)


def conv_bn_act_2d(x_nchw, w_oihw, gamma, beta, running_mean, running_var,
                   eps=1e-5, *, h_tile=32, cout_tile=128):
    N, Cin, H, W = x_nchw.shape
    Cout, Cin_w, KH, KW = w_oihw.shape
    assert Cin_w == Cin
    assert KH == KW and KH % 2 == 1, "odd square kernels only"
    pad = (KH - 1) // 2

    f32 = jnp.float32
    cin_p = _round_up(Cin, 128)            # lane-dense K
    cout_p = _round_up(Cout, 128)          # lane-dense output
    cout_t = min(cout_tile, cout_p)
    assert cout_p % cout_t == 0
    wpp = _round_up(W + 2 * pad, 16)       # bf16 sublane-tile friendly width
    ht = _pick_h_tile(H, h_tile)
    nh = H // ht
    ext = 16                               # flat-row slack for the dx shift
    assert ext <= wpp and KW - 1 <= ext
    rows = ht + 2 * pad + 1                # H halo + 1 slack row (covers ext)

    # ---- BatchNorm folding (inference semantics) ----
    inv_std = lax.rsqrt(running_var.astype(f32) + eps)
    scale = gamma.astype(f32) * inv_std
    bias = beta.astype(f32) - running_mean.astype(f32) * scale

    # Fold BN scale into the conv weights, pack to (KW, KH*cin_p, cout_p) with
    # K index = dy*cin_p + c, cast to bf16 for the MXU.
    w_t = jnp.transpose(w_oihw.astype(f32), (3, 2, 1, 0))      # (KW,KH,Cin,Cout)
    w_t = w_t * scale[None, None, None, :]
    w_pack = jnp.zeros((KW, KH, cin_p, cout_p), f32)
    w_pack = w_pack.at[:, :, :Cin, :Cout].set(w_t)
    w_pack = w_pack.reshape(KW, KH * cin_p, cout_p).astype(jnp.bfloat16)

    bias_p = jnp.zeros((1, cout_p), f32).at[0, :Cout].set(bias)

    # ---- input: NCHW -> NHWC, spatial/channel pad, bf16, halo'd H tiles ----
    x = jnp.transpose(x_nchw, (0, 2, 3, 1)).astype(jnp.bfloat16)
    x = jnp.pad(x, ((0, 0), (pad, pad + 1), (pad, wpp - W - pad),
                    (0, cin_p - Cin)))
    # Overlapping H tiles (halo materialized once so the grid stays fully
    # "parallel" with plain Blocked indexing).
    x_tiles = jnp.concatenate(
        [x[:, None, h * ht: h * ht + rows] for h in range(nh)], axis=1)
    x_tiles = x_tiles.reshape(N * nh, rows, wpp, cin_p)

    nb = N * nh
    nco = cout_p // cout_t
    kernel = functools.partial(_conv_bn_act_kernel, ht=ht, wpp=wpp, kh=KH,
                               kw=KW, ext=ext)

    # Grid order (b outer, c inner): the (larger) input tile stays resident
    # across the Cout tiles; only the small weight tile re-streams.
    out = pl.pallas_call(
        kernel,
        out_shape=jax.ShapeDtypeStruct((N * H, wpp, cout_p), jnp.float32),
        grid_spec=pltpu.PrefetchScalarGridSpec(
            num_scalar_prefetch=0,
            grid=(nb, nco),
            in_specs=[
                pl.BlockSpec((1, rows, wpp, cin_p), lambda b, c: (b, 0, 0, 0)),
                pl.BlockSpec((KW, KH * cin_p, cout_t), lambda b, c: (0, 0, c)),
                pl.BlockSpec((1, cout_t), lambda b, c: (0, c)),
            ],
            out_specs=pl.BlockSpec((ht, wpp, cout_t), lambda b, c: (b, 0, c)),
        ),
        compiler_params=pltpu.CompilerParams(
            dimension_semantics=("parallel", "parallel"),
            vmem_limit_bytes=48 * 1024 * 1024,
        ),
    )(x_tiles, w_pack, bias_p)

    out = out.reshape(N, H, wpp, cout_p)[:, :, :W, :Cout]
    return jnp.transpose(out, (0, 3, 1, 2))


def _reference(x, w, gamma, beta, running_mean, running_var, eps=1e-5,
               match_bf16=False):
    f32 = jnp.float32
    inv_std = 1.0 / jnp.sqrt(running_var.astype(f32) + eps)
    scale = gamma.astype(f32) * inv_std
    bias = beta.astype(f32) - running_mean.astype(f32) * scale
    w_fold = w.astype(f32) * scale[:, None, None, None]
    x = x.astype(f32)
    if match_bf16:
        x = x.astype(jnp.bfloat16).astype(f32)
        w_fold = w_fold.astype(jnp.bfloat16).astype(f32)
    y = lax.conv_general_dilated(
        x, w_fold, window_strides=(1, 1), padding="SAME",
        dimension_numbers=("NCHW", "OIHW", "NCHW"))
    z = y + bias[None, :, None, None]
    return z * jax.nn.sigmoid(z)


if __name__ == "__main__":
    key = jax.random.PRNGKey(0)
    k_x, k_w, k_g, k_b, k_m, k_v = jax.random.split(key, 6)

    N, Cin, H, W = 2, 4, 16, 16
    Cout, KH, KW = 8, 3, 3

    x = jax.random.normal(k_x, (N, Cin, H, W), jnp.float32)
    fan_in = Cin * KH * KW
    w = jax.random.normal(k_w, (Cout, Cin, KH, KW), jnp.float32) * (
        2.0 / fan_in) ** 0.5
    gamma = 1.0 + 0.1 * jax.random.normal(k_g, (Cout,), jnp.float32)
    beta = 0.1 * jax.random.normal(k_b, (Cout,), jnp.float32)
    running_mean = 0.1 * jax.random.normal(k_m, (Cout,), jnp.float32)
    running_var = jnp.abs(1.0 + 0.1 * jax.random.normal(
        k_v, (Cout,), jnp.float32))

    # h_tile=8 so the demo exercises multiple halo'd H tiles per image.
    out = conv_bn_act_2d(x, w, gamma, beta, running_mean, running_var,
                         h_tile=8)
    out = jax.block_until_ready(out)
    assert out.shape == (N, Cout, H, W)

    # Precision-matched reference (kernel feeds the MXU bf16 operands, f32
    # accumulation) -> tight tolerance.
    ref_m = _reference(x, w, gamma, beta, running_mean, running_var,
                       match_bf16=True)
    assert jnp.allclose(out, ref_m, atol=1e-2, rtol=1e-2), \
        "mismatch vs precision-matched reference"

    # Loose sanity check against the pure-f32 reference (bf16 input rounding).
    ref_f = _reference(x, w, gamma, beta, running_mean, running_var,
                       match_bf16=False)
    assert jnp.allclose(out, ref_f, atol=1e-1, rtol=1e-1), \
        "mismatch vs f32 reference"

    print("KERNEL_OK")
</pallas_src>

<mosaic_0001>
module attributes {stable_mosaic.version = 11 : i64} {
  func.func @_conv_bn_act_kernel(%arg0: i32, %arg1: i32, %arg2: memref<1x11x32x128xbf16, #tpu.memory_space<vmem>>, %arg3: memref<3x384x128xbf16, #tpu.memory_space<vmem>>, %arg4: memref<1x128xf32, #tpu.memory_space<vmem>>, %arg5: memref<8x32x128xf32, #tpu.memory_space<vmem>>) attributes {dimension_semantics = [#tpu.dimension_semantics<parallel>, #tpu.dimension_semantics<parallel>], iteration_bounds = array<i64: 4, 1>, scalar_prefetch = 0 : i64, scratch_operands = 0 : i64, tpu.core_type = #tpu.core_type<tc>, window_params = [{transform_indices = @transform_0, window_bounds = array<i64: 1, 11, 32, 128>}, {transform_indices = @transform_1, window_bounds = array<i64: 3, 384, 128>}, {transform_indices = @transform_2, window_bounds = array<i64: 1, 128>}, {transform_indices = @transform_3, window_bounds = array<i64: 8, 32, 128>}]} {
    %c0 = arith.constant 0 : index
    %c0_0 = arith.constant 0 : index
    %c0_1 = arith.constant 0 : index
    %c0_2 = arith.constant 0 : index
    %0 = vector.load %arg2[%c0, %c0_0, %c0_1, %c0_2] : memref<1x11x32x128xbf16, #tpu.memory_space<vmem>>, vector<1x11x32x128xbf16>
    %1 = vector.shape_cast %0 : vector<1x11x32x128xbf16> to vector<11x32x128xbf16>
    %2 = vector.shape_cast %1 : vector<11x32x128xbf16> to vector<352x128xbf16>
    %3 = vector.extract_strided_slice %2 {offsets = [0, 0], sizes = [272, 128], strides = [1, 1]} : vector<352x128xbf16> to vector<272x128xbf16>
    %4 = vector.extract_strided_slice %2 {offsets = [32, 0], sizes = [272, 128], strides = [1, 1]} : vector<352x128xbf16> to vector<272x128xbf16>
    %5 = vector.extract_strided_slice %2 {offsets = [64, 0], sizes = [272, 128], strides = [1, 1]} : vector<352x128xbf16> to vector<272x128xbf16>
    %6 = tpu.concatenate %3, %4, %5 in 1 : vector<272x128xbf16>, vector<272x128xbf16>, vector<272x128xbf16> -> vector<272x384xbf16>
    %c0_3 = arith.constant 0 : index
    %c0_4 = arith.constant 0 : index
    %c0_5 = arith.constant 0 : index
    %7 = vector.load %arg3[%c0_3, %c0_4, %c0_5] : memref<3x384x128xbf16, #tpu.memory_space<vmem>>, vector<1x384x128xbf16>
    %8 = vector.shape_cast %7 : vector<1x384x128xbf16> to vector<384x128xbf16>
    %cst = arith.constant dense<0.000000e+00> : vector<272x128xf32>
    %9 = tpu.matmul %6, %8, %cst {dimension_numbers = #tpu.dot_dimension_numbers<[1], [0], [0], [1], [0, 0, 1, 1], [], []>} : vector<272x384xbf16>, vector<384x128xbf16>, vector<272x128xf32> -> vector<272x128xf32>
    %10 = vector.extract_strided_slice %9 {offsets = [0, 0], sizes = [256, 128], strides = [1, 1]} : vector<272x128xf32> to vector<256x128xf32>
    %c1 = arith.constant 1 : index
    %c0_6 = arith.constant 0 : index
    %c0_7 = arith.constant 0 : index
    %11 = vector.load %arg3[%c1, %c0_6, %c0_7] : memref<3x384x128xbf16, #tpu.memory_space<vmem>>, vector<1x384x128xbf16>
    %12 = vector.shape_cast %11 : vector<1x384x128xbf16> to vector<384x128xbf16>
    %cst_8 = arith.constant dense<0.000000e+00> : vector<272x128xf32>
    %13 = tpu.matmul %6, %12, %cst_8 {dimension_numbers = #tpu.dot_dimension_numbers<[1], [0], [0], [1], [0, 0, 1, 1], [], []>} : vector<272x384xbf16>, vector<384x128xbf16>, vector<272x128xf32> -> vector<272x128xf32>
    %14 = vector.extract_strided_slice %13 {offsets = [1, 0], sizes = [256, 128], strides = [1, 1]} : vector<272x128xf32> to vector<256x128xf32>
    %15 = arith.addf %10, %14 : vector<256x128xf32>
    %c2 = arith.constant 2 : index
    %c0_9 = arith.constant 0 : index
    %c0_10 = arith.constant 0 : index
    %16 = vector.load %arg3[%c2, %c0_9, %c0_10] : memref<3x384x128xbf16, #tpu.memory_space<vmem>>, vector<1x384x128xbf16>
    %17 = vector.shape_cast %16 : vector<1x384x128xbf16> to vector<384x128xbf16>
    %cst_11 = arith.constant dense<0.000000e+00> : vector<272x128xf32>
    %18 = tpu.matmul %6, %17, %cst_11 {dimension_numbers = #tpu.dot_dimension_numbers<[1], [0], [0], [1], [0, 0, 1, 1], [], []>} : vector<272x384xbf16>, vector<384x128xbf16>, vector<272x128xf32> -> vector<272x128xf32>
    %19 = vector.extract_strided_slice %18 {offsets = [2, 0], sizes = [256, 128], strides = [1, 1]} : vector<272x128xf32> to vector<256x128xf32>
    %20 = arith.addf %15, %19 : vector<256x128xf32>
    %c0_12 = arith.constant 0 : index
    %c0_13 = arith.constant 0 : index
    %21 = vector.load %arg4[%c0_12, %c0_13] : memref<1x128xf32, #tpu.memory_space<vmem>>, vector<1x128xf32>
    %22 = vector.broadcast %21 : vector<1x128xf32> to vector<256x128xf32>
    %23 = arith.addf %20, %22 : vector<256x128xf32>
    %24 = arith.negf %23 : vector<256x128xf32>
    %25 = math.exp %24 : vector<256x128xf32>
    %cst_14 = arith.constant 1.000000e+00 : f32
    %26 = vector.broadcast %cst_14 : f32 to vector<256x128xf32>
    %27 = arith.addf %26, %25 : vector<256x128xf32>
    %28 = arith.divf %26, %27 : vector<256x128xf32>
    %29 = arith.mulf %23, %28 : vector<256x128xf32>
    %30 = vector.shape_cast %29 : vector<256x128xf32> to vector<8x32x128xf32>
    %c0_15 = arith.constant 0 : index
    %c0_16 = arith.constant 0 : index
    %c0_17 = arith.constant 0 : index
    %31 = vector.load %arg5[%c0_15, %c0_16, %c0_17] : memref<8x32x128xf32, #tpu.memory_space<vmem>>, vector<8x32x128xf32>
    tpu.vector_store %arg5[%c0_15, %c0_16, %c0_17], %30 {strides = array<i32>} : memref<8x32x128xf32, #tpu.memory_space<vmem>>, vector<8x32x128xf32>,
    return
  }
  func.func @transform_0(%arg0: i32, %arg1: i32) -> (i32, i32, i32, i32) {
    %c0_i32 = arith.constant 0 : i32
    %c0_i32_0 = arith.constant 0 : i32
    %c0_i32_1 = arith.constant 0 : i32
    %c0_i32_2 = arith.constant 0 : i32
    return %arg0, %c0_i32, %c0_i32_0, %c0_i32_1 : i32, i32, i32, i32
  }
  func.func @transform_1(%arg0: i32, %arg1: i32) -> (i32, i32, i32) {
    %c0_i32 = arith.constant 0 : i32
    %c0_i32_0 = arith.constant 0 : i32
    %c0_i32_1 = arith.constant 0 : i32
    return %c0_i32, %c0_i32_0, %arg1 : i32, i32, i32
  }
  func.func @transform_2(%arg0: i32, %arg1: i32) -> (i32, i32) {
    %c0_i32 = arith.constant 0 : i32
    %c0_i32_0 = arith.constant 0 : i32
    return %c0_i32, %arg1 : i32, i32
  }
  func.func @transform_3(%arg0: i32, %arg1: i32) -> (i32, i32, i32) {
    %c0_i32 = arith.constant 0 : i32
    %c0_i32_0 = arith.constant 0 : i32
    return %arg0, %c0_i32, %arg1 : i32, i32, i32
  }
}

</mosaic_0001>

<llo_original>
// kernel: tpu_custom_call.1
$region0: #{tpu_custom_call.1}
  #allocation0 [shape = 'u32[]', space=smem, size = 0x4, offset = 0x4, fixed_abs, tag = 'smem constant byte address 0x4 - core index']
  #allocation1 [shape = 'u32[72,128]{1,0:T(1,128)}', space=vmem, size = 0x9000, scoped, tag = 'internal scratch']
  %s0 = inlined_call_operand.hbm [shape: bf16[4,11,32,128], index: 0, kind: input, shape index: {}]
  %s1 = inlined_call_operand.hbm [shape: bf16[3,384,128], index: 1, kind: input, shape index: {}]
  %s2 = inlined_call_operand.vmem [shape: f32[1,128], index: 2, kind: input, shape index: {}]
  %s3 = inlined_call_operand.hbm [shape: f32[32,32,128], index: 3, kind: output, shape index: {}]
  %s4 = sld [smem:[#allocation0]]
  $region53: #{tpu_custom_call.1} parent=0
    _
  %s6 = ssub.s32 1, %s4
  %s7 = scalar_select 0, %s6, %s4
  $region1: #{tpu_custom_call.1} parent=0
    #allocation2 [shape = 'u8[180224]{0}', space=vmem, size = 0x2c000, scoped, tag = 'input window, operand 0']
    #allocation3 [shape = 's32[2]{0}', space=sflag, size = 0x8, scoped, tag = 'scoped memory for tpu_custom_call.1']
    #allocation4 [shape = 's32[2]{0}', space=sflag, size = 0x8, scoped, tag = 'scoped memory for tpu_custom_call.1']
    #allocation5 [shape = 'u8[294912]{0}', space=vmem, size = 0x48000, scoped, tag = 'input window, operand 1, single buffered']
    #allocation6 [shape = 's32[1]{0}', space=sflag, size = 0x4, scoped, tag = 'scoped memory for tpu_custom_call.1']
    #allocation7 [shape = 'u8[262144]{0}', space=vmem, size = 0x40000, scoped, tag = 'output window, operand 0']
    %8 = vsyncpa [#allocation3], 0
    %s9 = scalar_lea.sflag [#allocation3], 1
    %10 = vsyncpa %s9, 0
    %11 = vsyncpa [#allocation6], 0
    %12 = vsyncpa [#allocation4], 0
    %s13 = scalar_lea.sflag [#allocation4], 1
    %14 = vsyncpa %s13, 0
    loop: start=0, step=1, limit=6
    $region2: #{tpu_custom_call.1} parent=1 // loop_pre_header
      _
    $region3: #{tpu_custom_call.1} parent=1 // loop_header
      %s16 = sphi 0, %s20
      %p17 = scmp.ge.s32.totalorder %s16, 6
      %s23 = sphi 0, %s35
      %s24 = sphi 0, %s31
      %s25 = sphi 0, %s23
      %s26 = sphi 0, %s24
      %s27 = sphi 0, %s25
      %s28 = sphi 0, %s26
      %s38 = sphi 0, %s40
      %s41 = sphi 0, %s38
      %s42 = sphi 0, %s41
      %s58 = sphi 0, %s42
      %s64 = sphi 0, %s66
      %s67 = sphi 0, %s64
      %s68 = sphi 0, %s67
      %s84 = sphi 0, %s68
      %s90 = sphi 0, %s92
      %s93 = sphi 0, %s90
      %s94 = sphi 0, %s93
      %s110 = sphi 0, %s94
      %s118 = sphi 0, %s120
      %s121 = sphi 0, %s118
      %s122 = sphi 0, %s121
      %s138 = sphi 0, %s122
    $region4: #{tpu_custom_call.1} parent=1 // loop_header_branch
      %19 = sbr.rel (%p17) target = $region8
    $region5: #{tpu_custom_call.1} parent=1 // loop_body
      %s21 = ssub.s32 %s16, 1
      %s22 = ssub.s32 %s16, 2
      %s29 = sadd.s32 1, %s24
      %p30 = scmp.ge.s32.totalorder %s29, 1
      %s31 = scalar_select %p30, 0, %s29
      %s32 = sadd.s32 1, %s23
      %s33 = scalar_select %p30, %s32, %s23
      %p34 = scmp.ge.s32.totalorder %s33, 4
      %s35 = scalar_select %p34, 0, %s33
      %s36 = ssub.s32 %s23, %s35
      %p37 = scmp.eq.s32.totalorder %s36, 0
      %s39 = sadd.s32 %s38, 1
      %s40 = scalar_select %p37, %s38, %s39
      %p43 = pneg %p37
      %p44 = scmp.eq.s32.totalorder %s16, 3
      %p45 = por %p43, %p44
      %p46 = scmp.ne.s32.totalorder %s38, %s41
      %p47 = scmp.eq.s32.totalorder %s16, 0
      %p48 = por %p46, %p47
      %p49 = scmp.ne.s32.totalorder %s38, %s41
      %p50 = scmp.eq.s32.totalorder %s21, 3
      %p51 = por %p49, %p50
      %p52 = scmp.ne.s32.totalorder %s41, %s42
      %p53 = scmp.eq.s32.totalorder %s21, 0
      %p54 = por %p52, %p53
      %p55 = scmp.ne.s32.totalorder %s41, %s42
      %p56 = scmp.eq.s32.totalorder %s22, 3
      %p57 = por %p55, %p56
      %p59 = scmp.ne.s32.totalorder %s42, %s58
      %p60 = scmp.eq.s32.totalorder %s22, 0
      %p61 = por %p59, %p60
      %s62 = ssub.s32 %s24, %s31
      %p63 = scmp.eq.s32.totalorder %s62, 0
      %s65 = sadd.s32 %s64, 1
      %s66 = scalar_select %p63, %s64, %s65
      %p69 = pneg %p63
      %p70 = scmp.eq.s32.totalorder %s16, 3
      %p71 = por %p69, %p70
      %p72 = scmp.ne.s32.totalorder %s64, %s67
      %p73 = scmp.eq.s32.totalorder %s16, 0
      %p74 = por %p72, %p73
      %p75 = scmp.ne.s32.totalorder %s64, %s67
      %p76 = scmp.eq.s32.totalorder %s21, 3
      %p77 = por %p75, %p76
      %p78 = scmp.ne.s32.totalorder %s67, %s68
      %p79 = scmp.eq.s32.totalorder %s21, 0
      %p80 = por %p78, %p79
      %p81 = scmp.ne.s32.totalorder %s67, %s68
      %p82 = scmp.eq.s32.totalorder %s22, 3
      %p83 = por %p81, %p82
      %p85 = scmp.ne.s32.totalorder %s68, %s84
      %p86 = scmp.eq.s32.totalorder %s22, 0
      %p87 = por %p85, %p86
      %s88 = ssub.s32 %s24, %s31
      %p89 = scmp.eq.s32.totalorder %s88, 0
      %s91 = sadd.s32 %s90, 1
      %s92 = scalar_select %p89, %s90, %s91
      %p95 = pneg %p89
      %p96 = scmp.eq.s32.totalorder %s16, 3
      %p97 = por %p95, %p96
      %p98 = scmp.ne.s32.totalorder %s90, %s93
      %p99 = scmp.eq.s32.totalorder %s16, 0
      %p100 = por %p98, %p99
      %p101 = scmp.ne.s32.totalorder %s90, %s93
      %p102 = scmp.eq.s32.totalorder %s21, 3
      %p103 = por %p101, %p102
      %p104 = scmp.ne.s32.totalorder %s93, %s94
      %p105 = scmp.eq.s32.totalorder %s21, 0
      %p106 = por %p104, %p105
      %p107 = scmp.ne.s32.totalorder %s93, %s94
      %p108 = scmp.eq.s32.totalorder %s22, 3
      %p109 = por %p107, %p108
      %p111 = scmp.ne.s32.totalorder %s94, %s110
      %p112 = scmp.eq.s32.totalorder %s22, 0
      %p113 = por %p111, %p112
      %s114 = ssub.s32 %s23, %s35
      %s115 = ssub.s32 %s24, %s31
      %s116 = sor.u32 %s114, %s115
      %p117 = scmp.eq.s32.totalorder %s116, 0
      %s119 = sadd.s32 %s118, 1
      %s120 = scalar_select %p117, %s118, %s119
      %p123 = pneg %p117
      %p124 = scmp.eq.s32.totalorder %s16, 3
      %p125 = por %p123, %p124
      %p126 = scmp.ne.s32.totalorder %s118, %s121
      %p127 = scmp.eq.s32.totalorder %s16, 0
      %p128 = por %p126, %p127
      %p129 = scmp.ne.s32.totalorder %s118, %s121
      %p130 = scmp.eq.s32.totalorder %s21, 3
      %p131 = por %p129, %p130
      %p132 = scmp.ne.s32.totalorder %s121, %s122
      %p133 = scmp.eq.s32.totalorder %s21, 0
      %p134 = por %p132, %p133
      %p135 = scmp.ne.s32.totalorder %s121, %s122
      %p136 = scmp.eq.s32.totalorder %s22, 3
      %p137 = por %p135, %p136
      %p139 = scmp.ne.s32.totalorder %s122, %s138
      %p140 = scmp.eq.s32.totalorder %s22, 0
      %p141 = por %p139, %p140
      %p142 = scmp.le.s32.totalorder 1, %s16
      %p143 = scmp.lt.s32.totalorder %s16, 5
      %p144 = pnand %p142, %p143
      %p145 = pneg %p144
      // Predicated region
      $region9: #{tpu_custom_call.1} parent=5 // pred_check
        _
      $region10: #{tpu_custom_call.1} parent=5 // pred_check_branch
        %147 = sbr.rel (%p144) target = $region12
      $region11: #{tpu_custom_call.1} parent=5 // pred_region
        %s148 = ssub.s32 %s16, 1
        // Predicated region
        $region13: #{tpu_custom_call.1} parent=11 // pred_check
          %p149 = pneg %p80
        $region14: #{tpu_custom_call.1} parent=11 // pred_check_branch
          %151 = sbr.rel (%p149) target = $region16
        $region15: #{tpu_custom_call.1} parent=11 // pred_region
          %153 = vsyncadd [#allocation6], 0
          %s154 = smul.addr %s26, 4
          %s155 = scalar_lea.hbm %s1, %s154
          %s156 = sshll.u32 %s155, 4
          %s157 = int_to_ptr.hbm [resolvable:$true] %s156
          %s158 = sshll.u32 [#allocation5], 4
          %s159 = int_to_ptr.vmem [resolvable:$true] %s158
          %164 = dma.hbm_to_vmem [thread:$0]  %s157, 9216, %s159, [#allocation6], 64, 64, 4
        $region16: #{tpu_custom_call.1} parent=11 // pred_fallthru
          _
        // Predicated region
        $region17: #{tpu_custom_call.1} parent=11 // pred_check
          %p165 = pneg %p106
        $region18: #{tpu_custom_call.1} parent=11 // pred_check_branch
          %167 = sbr.rel (%p165) target = $region20
        $region19: #{tpu_custom_call.1} parent=11 // pred_region
          %p168 = scmp.lt.s32.totalorder %s26, 0
          %s169 = scalar_select %p168, %s26, 0
          %s170 = scalar_lea.vmem %s2, %s169
        $region20: #{tpu_custom_call.1} parent=11 // pred_fallthru
          _
      $region12: #{tpu_custom_call.1} parent=5 // pred_fallthru
        _
      %p171 = scmp.lt.s32.totalorder %s16, 4
      // Predicated region
      $region21: #{tpu_custom_call.1} parent=5 // pred_check
        %p172 = pneg %p171
      $region22: #{tpu_custom_call.1} parent=5 // pred_check_branch
        %174 = sbr.rel (%p172) target = $region24
      $region23: #{tpu_custom_call.1} parent=5 // pred_region
        // Predicated region
        $region25: #{tpu_custom_call.1} parent=23 // pred_check
          %p175 = pneg %p48
        $region26: #{tpu_custom_call.1} parent=23 // pred_check_branch
          %177 = sbr.rel (%p175) target = $region28
        $region27: #{tpu_custom_call.1} parent=23 // pred_region
          %s178 = sand.u32 %s38, 1
          %s179 = scalar_lea.sflag [#allocation3], %s178
          %s180 = sand.u32 %s38, 1
          %s181 = smul.addr %s180, 176
          %s182 = scalar_lea.vmem [#allocation2], %s181
          %184 = vsyncadd %s179, 0
          %s185 = smul.addr %s23, 44
          %s186 = smul.addr %s185, 4
          %s187 = scalar_lea.hbm %s0, %s186
          %s188 = sshll.u32 %s187, 4
          %s189 = int_to_ptr.hbm [resolvable:$true] %s188
          %s190 = sshll.u32 %s182, 4
          %s191 = int_to_ptr.vmem [resolvable:$true] %s190
          %196 = dma.hbm_to_vmem [thread:$0]  %s189, 2816, %s191, %s179, 64, 64, 4
        $region28: #{tpu_custom_call.1} parent=23 // pred_fallthru
          _
      $region24: #{tpu_custom_call.1} parent=5 // pred_fallthru
        _
      %p197 = scmp.le.s32.totalorder 1, %s16
      %p198 = scmp.lt.s32.totalorder %s16, 5
      %p199 = pnand %p197, %p198
      %p200 = pneg %p199
      // Predicated region
      $region29: #{tpu_custom_call.1} parent=5 // pred_check
        _
      $region30: #{tpu_custom_call.1} parent=5 // pred_check_branch
        %202 = sbr.rel (%p199) target = $region32
      $region31: #{tpu_custom_call.1} parent=5 // pred_region
        %s203 = ssub.s32 %s16, 1
        %s204 = sand.u32 %s41, 1
        %s205 = scalar_lea.sflag [#allocation3], %s204
        %s206 = sand.u32 %s41, 1
        %s207 = smul.addr %s206, 176
        %s208 = scalar_lea.vmem [#allocation2], %s207
        // Predicated region
        $region33: #{tpu_custom_call.1} parent=31 // pred_check
          %p209 = pneg %p54
        $region34: #{tpu_custom_call.1} parent=31 // pred_check_branch
          %211 = sbr.rel (%p209) target = $region36
        $region35: #{tpu_custom_call.1} parent=31 // pred_region
          %213 = dma.done %s205, 2816
        $region36: #{tpu_custom_call.1} parent=31 // pred_fallthru
          _
        // Predicated region
        $region37: #{tpu_custom_call.1} parent=31 // pred_check
          %p214 = pneg %p80
        $region38: #{tpu_custom_call.1} parent=31 // pred_check_branch
          %216 = sbr.rel (%p214) target = $region40
        $region39: #{tpu_custom_call.1} parent=31 // pred_region
          %218 = dma.done [#allocation6], 9216
        $region40: #{tpu_custom_call.1} parent=31 // pred_fallthru
          _
        %s219 = sand.u32 %s41, 1
        %s220 = scalar_lea.sflag [#allocation3], %s219
        %s221 = sand.u32 %s41, 1
        %s222 = smul.addr %s221, 176
        %s223 = scalar_lea.vmem [#allocation2], %s222
        %p224 = pneg %p54
        %p225 = pneg %p51
        %p226 = pneg %p80
        %p227 = pneg %p77
        %p228 = scmp.lt.s32.totalorder %s26, 0
        %s229 = scalar_select %p228, %s26, 0
        %s230 = scalar_lea.vmem %s2, %s229
        %p231 = pneg %p106
        %p232 = pneg %p103
        %p233 = pneg %p134
        %p234 = pneg %p131
        %s235 = sand.u32 %s121, 1
        %s236 = scalar_lea.sflag [#allocation4], %s235
        %s237 = sand.u32 %s121, 1
        %s238 = smul.addr %s237, 256
        %s239 = scalar_lea.vmem [#allocation7], %s238
        %p240 = scmp.lt.s32.totalorder %s26, 0
        %s241 = scalar_select %p240, %s26, 0
        %s242 = scalar_lea.vmem %s2, %s241
        %s243 = smul.u32 8, %s25
        %v244 = vld [vmem:[%s208] sm:$0xf]
        %v245 = vld [vmem:[%s208 + $0x4] sm:$0xf]
        %v246 = vld [vmem:[%s208 + $0x8] sm:$0xf]
        %v247 = vld [vmem:[%s208 + $0xc] sm:$0xf]
        %v248 = vld [vmem:[%s208 + $0x10] sm:$0xf]
        %v249 = vld [vmem:[%s208 + $0x14] sm:$0xf]
        %v250 = vld [vmem:[%s208 + $0x18] sm:$0xf]
        %v251 = vld [vmem:[%s208 + $0x1c] sm:$0xf]
        %v252 = vld [vmem:[%s208 + $0x20] sm:$0xf]
        %v253 = vld [vmem:[%s208 + $0x24] sm:$0xf]
        %v254 = vld [vmem:[%s208 + $0x28] sm:$0xf]
        %v255 = vld [vmem:[%s208 + $0x2c] sm:$0xf]
        %v256 = vld [vmem:[%s208 + $0x30] sm:$0xf]
        %v257 = vld [vmem:[%s208 + $0x34] sm:$0xf]
        %v258 = vld [vmem:[%s208 + $0x38] sm:$0xf]
        %v259 = vld [vmem:[%s208 + $0x3c] sm:$0xf]
        %v260 = vld [vmem:[%s208 + $0x40] sm:$0xf]
        %v261 = vld [vmem:[%s208 + $0x44] sm:$0xf]
        %v262 = vld [vmem:[%s208 + $0x48] sm:$0xf]
        %v263 = vld [vmem:[%s208 + $0x4c] sm:$0xf]
        %v264 = vld [vmem:[%s208 + $0x50] sm:$0xf]
        %v265 = vld [vmem:[%s208 + $0x54] sm:$0xf]
        %v266 = vld [vmem:[%s208 + $0x58] sm:$0xf]
        %v267 = vld [vmem:[%s208 + $0x5c] sm:$0xf]
        %v268 = vld [vmem:[%s208 + $0x60] sm:$0xf]
        %v269 = vld [vmem:[%s208 + $0x64] sm:$0xf]
        %v270 = vld [vmem:[%s208 + $0x68] sm:$0xf]
        %v271 = vld [vmem:[%s208 + $0x6c] sm:$0xf]
        %v272 = vld [vmem:[%s208 + $0x70] sm:$0xf]
        %v273 = vld [vmem:[%s208 + $0x74] sm:$0xf]
        %v274 = vld [vmem:[%s208 + $0x78] sm:$0xf]
        %v275 = vld [vmem:[%s208 + $0x7c] sm:$0xf]
        %v276 = vld [vmem:[%s208 + $0x80] sm:$0xf]
        %v277 = vld [vmem:[%s208 + $0x84] sm:$0xf]
        %v278 = vld [vmem:[%s208 + $0x88] sm:$0xf]
        %v279 = vld [vmem:[%s208 + $0x8c] sm:$0xf]
        %v280 = vld [vmem:[%s208 + $0x90] sm:$0xf]
        %v281 = vld [vmem:[%s208 + $0x94] sm:$0xf]
        %v282 = vld [vmem:[%s208 + $0x98] sm:$0xf]
        %v283 = vld [vmem:[%s208 + $0x9c] sm:$0xf]
        %v284 = vld [vmem:[%s208 + $0xa0] sm:$0xf]
        %v285 = vld [vmem:[%s208 + $0xa4] sm:$0xf]
        %v320 = vunpack.c.l.b16 %v244
        %v321 = vunpack.c.l.b16 %v245
        %v322 = vunpack.c.l.b16 %v246
        %v323 = vunpack.c.l.b16 %v247
        %v324 = vunpack.c.l.b16 %v248
        %v325 = vunpack.c.l.b16 %v249
        %v326 = vunpack.c.l.b16 %v250
        %v327 = vunpack.c.l.b16 %v251
        %v328 = vunpack.c.l.b16 %v252
        %v329 = vunpack.c.l.b16 %v253
        %v330 = vunpack.c.l.b16 %v254
        %v331 = vunpack.c.l.b16 %v255
        %v332 = vunpack.c.l.b16 %v256
        %v333 = vunpack.c.l.b16 %v257
        %v334 = vunpack.c.l.b16 %v258
        %v335 = vunpack.c.l.b16 %v259
        %v336 = vunpack.c.l.b16 %v260
        %v337 = vunpack.c.l.b16 %v261
        %v338 = vunpack.c.l.b16 %v262
        %v339 = vunpack.c.l.b16 %v263
        %v340 = vunpack.c.l.b16 %v264
        %v341 = vunpack.c.l.b16 %v265
        %v342 = vunpack.c.l.b16 %v266
        %v343 = vunpack.c.l.b16 %v267
        %v344 = vunpack.c.l.b16 %v268
        %v345 = vunpack.c.l.b16 %v269
        %v346 = vunpack.c.l.b16 %v270
        %v347 = vunpack.c.l.b16 %v271
        %v348 = vunpack.c.l.b16 %v272
        %v349 = vunpack.c.l.b16 %v273
        %v350 = vunpack.c.l.b16 %v274
        %v351 = vunpack.c.l.b16 %v275
        %v352 = vunpack.c.l.b16 %v276
        %v353 = vunpack.c.l.b16 %v277
        %v354 = vpack.c.b16 %v321, %v320
        %v355 = vpack.c.b16 %v323, %v322
        %v356 = vpack.c.b16 %v325, %v324
        %v357 = vpack.c.b16 %v327, %v326
        %v358 = vpack.c.b16 %v329, %v328
        %v359 = vpack.c.b16 %v331, %v330
        %v360 = vpack.c.b16 %v333, %v332
        %v361 = vpack.c.b16 %v335, %v334
        %v362 = vpack.c.b16 %v337, %v336
        %v363 = vpack.c.b16 %v339, %v338
        %v364 = vpack.c.b16 %v341, %v340
        %v365 = vpack.c.b16 %v343, %v342
        %v366 = vpack.c.b16 %v345, %v344
        %v367 = vpack.c.b16 %v347, %v346
        %v368 = vpack.c.b16 %v349, %v348
        %v369 = vpack.c.b16 %v351, %v350
        %v370 = vpack.c.b16 %v353, %v352
        %v392 = vunpack.c.l.b16 %v278
        %v393 = vunpack.c.l.b16 %v279
        %v394 = vunpack.c.l.b16 %v280
        %v395 = vunpack.c.l.b16 %v281
        %v396 = vpack.c.b16 %v393, %v392
        %v397 = vpack.c.b16 %v395, %v394
        %v404 = vunpack.c.l.b16 %v282
        %v405 = vunpack.c.l.b16 %v283
        %v406 = vunpack.c.l.b16 %v284
        %v407 = vunpack.c.l.b16 %v285
        %v408 = vpack.c.b16 %v405, %v404
        %v409 = vpack.c.b16 %v407, %v406
        %v412 = vld [vmem:[#allocation5] sm:$0xf]
        %v413 = vld [vmem:[#allocation5 + $0x4] sm:$0xf]
        %v414 = vld [vmem:[#allocation5 + $0x8] sm:$0xf]
        %v415 = vld [vmem:[#allocation5 + $0xc] sm:$0xf]
        %v416 = vld [vmem:[#allocation5 + $0x10] sm:$0xf]
        %v417 = vld [vmem:[#allocation5 + $0x14] sm:$0xf]
        %v418 = vld [vmem:[#allocation5 + $0x18] sm:$0xf]
        %v419 = vld [vmem:[#allocation5 + $0x1c] sm:$0xf]
        %v420 = vld [vmem:[#allocation5 + $0x20] sm:$0xf]
        %v421 = vld [vmem:[#allocation5 + $0x24] sm:$0xf]
        %v422 = vld [vmem:[#allocation5 + $0x28] sm:$0xf]
        %v423 = vld [vmem:[#allocation5 + $0x2c] sm:$0xf]
        %v424 = vld [vmem:[#allocation5 + $0x30] sm:$0xf]
        %v425 = vld [vmem:[#allocation5 + $0x34] sm:$0xf]
        %v426 = vld [vmem:[#allocation5 + $0x38] sm:$0xf]
        %v427 = vld [vmem:[#allocation5 + $0x3c] sm:$0xf]
        %v428 = vld [vmem:[#allocation5 + $0x40] sm:$0xf]
        %v429 = vld [vmem:[#allocation5 + $0x44] sm:$0xf]
        %v430 = vld [vmem:[#allocation5 + $0x48] sm:$0xf]
        %v431 = vld [vmem:[#allocation5 + $0x4c] sm:$0xf]
        %v432 = vld [vmem:[#allocation5 + $0x50] sm:$0xf]
        %v433 = vld [vmem:[#allocation5 + $0x54] sm:$0xf]
        %v434 = vld [vmem:[#allocation5 + $0x58] sm:$0xf]
        %v435 = vld [vmem:[#allocation5 + $0x5c] sm:$0xf]
        %v436 = vld [vmem:[#allocation5 + $0x60] sm:$0xf]
        %v437 = vld [vmem:[#allocation5 + $0x64] sm:$0xf]
        %v438 = vld [vmem:[#allocation5 + $0x68] sm:$0xf]
        %v439 = vld [vmem:[#allocation5 + $0x6c] sm:$0xf]
        %v440 = vld [vmem:[#allocation5 + $0x70] sm:$0xf]
        %v441 = vld [vmem:[#allocation5 + $0x74] sm:$0xf]
        %v442 = vld [vmem:[#allocation5 + $0x78] sm:$0xf]
        %v443 = vld [vmem:[#allocation5 + $0x7c] sm:$0xf]
        %v444 = vld [vmem:[#allocation5 + $0x80] sm:$0xf]
        %v445 = vld [vmem:[#allocation5 + $0x84] sm:$0xf]
        %v446 = vld [vmem:[#allocation5 + $0x88] sm:$0xf]
        %v447 = vld [vmem:[#allocation5 + $0x8c] sm:$0xf]
        %v448 = vld [vmem:[#allocation5 + $0x90] sm:$0xf]
        %v449 = vld [vmem:[#allocation5 + $0x94] sm:$0xf]
        %v450 = vld [vmem:[#allocation5 + $0x98] sm:$0xf]
        %v451 = vld [vmem:[#allocation5 + $0x9c] sm:$0xf]
        %v452 = vld [vmem:[#allocation5 + $0xa0] sm:$0xf]
        %v453 = vld [vmem:[#allocation5 + $0xa4] sm:$0xf]
        %v454 = vld [vmem:[#allocation5 + $0xa8] sm:$0xf]
        %v455 = vld [vmem:[#allocation5 + $0xac] sm:$0xf]
        %v456 = vld [vmem:[#allocation5 + $0xb0] sm:$0xf]
        %v457 = vld [vmem:[#allocation5 + $0xb4] sm:$0xf]
        %v458 = vld [vmem:[#allocation5 + $0xb8] sm:$0xf]
        %v459 = vld [vmem:[#allocation5 + $0xbc] sm:$0xf]
        %v508 = vunpack.c.l.b16 %v412
        %v509 = vunpack.c.l.b16 %v413
        %v510 = vunpack.c.l.b16 %v414
        %v511 = vunpack.c.l.b16 %v415
        %v512 = vunpack.c.l.b16 %v416
        %v513 = vunpack.c.l.b16 %v417
        %v514 = vunpack.c.l.b16 %v418
        %v515 = vunpack.c.l.b16 %v419
        %v516 = vunpack.c.l.b16 %v420
        %v517 = vunpack.c.l.b16 %v421
        %v518 = vunpack.c.l.b16 %v422
        %v519 = vunpack.c.l.b16 %v423
        %v520 = vunpack.c.l.b16 %v424
        %v521 = vunpack.c.l.b16 %v425
        %v522 = vunpack.c.l.b16 %v426
        %v523 = vunpack.c.l.b16 %v427
        %v524 = vunpack.c.l.b16 %v428
        %v525 = vunpack.c.l.b16 %v429
        %v526 = vunpack.c.l.b16 %v430
        %v527 = vunpack.c.l.b16 %v431
        %v528 = vunpack.c.l.b16 %v432
        %v529 = vunpack.c.l.b16 %v433
        %v530 = vunpack.c.l.b16 %v434
        %v531 = vunpack.c.l.b16 %v435
        %v532 = vunpack.c.l.b16 %v436
        %v533 = vunpack.c.l.b16 %v437
        %v534 = vunpack.c.l.b16 %v438
        %v535 = vunpack.c.l.b16 %v439
        %v536 = vunpack.c.l.b16 %v440
        %v537 = vunpack.c.l.b16 %v441
        %v538 = vunpack.c.l.b16 %v442
        %v539 = vunpack.c.l.b16 %v443
        %v540 = vunpack.c.l.b16 %v444
        %v541 = vunpack.c.l.b16 %v445
        %v542 = vunpack.c.l.b16 %v446
        %v543 = vunpack.c.l.b16 %v447
        %v544 = vunpack.c.l.b16 %v448
        %v545 = vunpack.c.l.b16 %v449
        %v546 = vunpack.c.l.b16 %v450
        %v547 = vunpack.c.l.b16 %v451
        %v548 = vunpack.c.l.b16 %v452
        %v549 = vunpack.c.l.b16 %v453
        %v550 = vunpack.c.l.b16 %v454
        %v551 = vunpack.c.l.b16 %v455
        %v552 = vunpack.c.l.b16 %v456
        %v553 = vunpack.c.l.b16 %v457
        %v554 = vunpack.c.l.b16 %v458
        %v555 = vunpack.c.l.b16 %v459
        %v556 = vpack.c.b16 %v509, %v508
        %v557 = vpack.c.b16 %v511, %v510
        %v558 = vpack.c.b16 %v513, %v512
        %v559 = vpack.c.b16 %v515, %v514
        %v560 = vpack.c.b16 %v517, %v516
        %v561 = vpack.c.b16 %v519, %v518
        %v562 = vpack.c.b16 %v521, %v520
        %v563 = vpack.c.b16 %v523, %v522
        %v564 = vpack.c.b16 %v525, %v524
        %v565 = vpack.c.b16 %v527, %v526
        %v566 = vpack.c.b16 %v529, %v528
        %v567 = vpack.c.b16 %v531, %v530
        %v568 = vpack.c.b16 %v533, %v532
        %v569 = vpack.c.b16 %v535, %v534
        %v570 = vpack.c.b16 %v537, %v536
        %v571 = vpack.c.b16 %v539, %v538
        %v572 = vpack.c.b16 %v541, %v540
        %v573 = vpack.c.b16 %v543, %v542
        %v574 = vpack.c.b16 %v545, %v544
        %v575 = vpack.c.b16 %v547, %v546
        %v576 = vpack.c.b16 %v549, %v548
        %v577 = vpack.c.b16 %v551, %v550
        %v578 = vpack.c.b16 %v553, %v552
        %v579 = vpack.c.b16 %v555, %v554
        %604 = vmatpush.bf16.msra.mxu0 %v563
        %605 = vmatpush.bf16.msra.mxu0 %v562
        %606 = vmatpush.bf16.msra.mxu0 %v561
        %607 = vmatpush.bf16.msra.mxu0 %v560
        %608 = vmatpush.bf16.msra.mxu0 %v559
        %609 = vmatpush.bf16.msra.mxu0 %v558
        %610 = vmatpush.bf16.msra.mxu0 %v557
        %611 = vmatpush.bf16.msra.mxu0 %v556
        %612 = vmatmul.bf16.gmra.mxu0 %v354
        %v613 = vpop.f32.mrf.mxu0
        %v614 = vadd.f32 0.0, %v613
        %v615 = vpop.f32.mrf.mxu0
        %v616 = vadd.f32 0.0, %v615
        %617 = vmatmul.bf16.gmra.mxu0 %v355
        %v618 = vpop.f32.mrf.mxu0
        %v619 = vadd.f32 0.0, %v618
        %v620 = vpop.f32.mrf.mxu0
        %v621 = vadd.f32 0.0, %v620
        %622 = vmatmul.bf16.gmra.mxu0 %v356
        %v623 = vpop.f32.mrf.mxu0
        %v624 = vadd.f32 0.0, %v623
        %v625 = vpop.f32.mrf.mxu0
        %v626 = vadd.f32 0.0, %v625
        %627 = vmatmul.bf16.gmra.mxu0 %v357
        %v628 = vpop.f32.mrf.mxu0
        %v629 = vadd.f32 0.0, %v628
        %v630 = vpop.f32.mrf.mxu0
        %v631 = vadd.f32 0.0, %v630
        %632 = vmatmul.bf16.gmra.mxu0 %v358
        %v633 = vpop.f32.mrf.mxu0
        %v634 = vadd.f32 0.0, %v633
        %v635 = vpop.f32.mrf.mxu0
        %v636 = vadd.f32 0.0, %v635
        %637 = vmatmul.bf16.gmra.mxu0 %v359
        %v638 = vpop.f32.mrf.mxu0
        %v639 = vadd.f32 0.0, %v638
        %v640 = vpop.f32.mrf.mxu0
        %v641 = vadd.f32 0.0, %v640
        %642 = vmatmul.bf16.gmra.mxu0 %v360
        %v643 = vpop.f32.mrf.mxu0
        %v644 = vadd.f32 0.0, %v643
        %v645 = vpop.f32.mrf.mxu0
        %v646 = vadd.f32 0.0, %v645
        %647 = vmatmul.bf16.gmra.mxu0 %v361
        %v648 = vpop.f32.mrf.mxu0
        %v649 = vadd.f32 0.0, %v648
        %v650 = vpop.f32.mrf.mxu0
        %v651 = vadd.f32 0.0, %v650
        %652 = vmatmul.bf16.gmra.mxu0 %v362
        %v653 = vpop.f32.mrf.mxu0
        %v654 = vadd.f32 0.0, %v653
        %v655 = vpop.f32.mrf.mxu0
        %v656 = vadd.f32 0.0, %v655
        %657 = vmatmul.bf16.gmra.mxu0 %v363
        %v658 = vpop.f32.mrf.mxu0
        %v659 = vadd.f32 0.0, %v658
        %v660 = vpop.f32.mrf.mxu0
        %v661 = vadd.f32 0.0, %v660
        %662 = vmatmul.bf16.gmra.mxu0 %v364
        %v663 = vpop.f32.mrf.mxu0
        %v664 = vadd.f32 0.0, %v663
        %v665 = vpop.f32.mrf.mxu0
        %v666 = vadd.f32 0.0, %v665
        %667 = vmatmul.bf16.gmra.mxu0 %v365
        %v668 = vpop.f32.mrf.mxu0
        %v669 = vadd.f32 0.0, %v668
        %v670 = vpop.f32.mrf.mxu0
        %v671 = vadd.f32 0.0, %v670
        %672 = vmatmul.bf16.gmra.mxu0 %v366
        %v673 = vpop.f32.mrf.mxu0
        %v674 = vadd.f32 0.0, %v673
        %v675 = vpop.f32.mrf.mxu0
        %v676 = vadd.f32 0.0, %v675
        %677 = vmatmul.bf16.gmra.mxu0 %v367
        %v678 = vpop.f32.mrf.mxu0
        %v679 = vadd.f32 0.0, %v678
        %v680 = vpop.f32.mrf.mxu0
        %v681 = vadd.f32 0.0, %v680
        %682 = vmatmul.bf16.gmra.mxu0 %v368
        %v683 = vpop.f32.mrf.mxu0
        %v684 = vadd.f32 0.0, %v683
        %v685 = vpop.f32.mrf.mxu0
        %v686 = vadd.f32 0.0, %v685
        %687 = vmatmul.bf16.gmra.mxu0 %v369
        %v688 = vpop.f32.mrf.mxu0
        %v689 = vadd.f32 0.0, %v688
        %v690 = vpop.f32.mrf.mxu0
        %v691 = vadd.f32 0.0, %v690
        %692 = vmatmul.bf16.gmra.mxu0 %v370
        %v693 = vpop.f32.mrf.mxu0
        %v694 = vpop.f32.mrf.mxu0
        %695 = vdwg.mxu0
        %696 = vmatpush.bf16.msra.mxu0 %v571
        %697 = vmatpush.bf16.msra.mxu0 %v570
        %698 = vmatpush.bf16.msra.mxu0 %v569
        %699 = vmatpush.bf16.msra.mxu0 %v568
        %700 = vmatpush.bf16.msra.mxu0 %v567
        %701 = vmatpush.bf16.msra.mxu0 %v566
        %702 = vmatpush.bf16.msra.mxu0 %v565
        %703 = vmatpush.bf16.msra.mxu0 %v564
        %704 = vmatmul.bf16.gmra.mxu0 %v356
        %v705 = vpop.f32.mrf.mxu0
        %v706 = vadd.f32 %v614, %v705
        %v707 = vpop.f32.mrf.mxu0
        %v708 = vadd.f32 %v616, %v707
        %709 = vmatmul.bf16.gmra.mxu0 %v357
        %v710 = vpop.f32.mrf.mxu0
        %v711 = vadd.f32 %v619, %v710
        %v712 = vpop.f32.mrf.mxu0
        %v713 = vadd.f32 %v621, %v712
        %714 = vmatmul.bf16.gmra.mxu0 %v358
        %v715 = vpop.f32.mrf.mxu0
        %v716 = vadd.f32 %v624, %v715
        %v717 = vpop.f32.mrf.mxu0
        %v718 = vadd.f32 %v626, %v717
        %719 = vmatmul.bf16.gmra.mxu0 %v359
        %v720 = vpop.f32.mrf.mxu0
        %v721 = vadd.f32 %v629, %v720
        %v722 = vpop.f32.mrf.mxu0
        %v723 = vadd.f32 %v631, %v722
        %724 = vmatmul.bf16.gmra.mxu0 %v360
        %v725 = vpop.f32.mrf.mxu0
        %v726 = vadd.f32 %v634, %v725
        %v727 = vpop.f32.mrf.mxu0
        %v728 = vadd.f32 %v636, %v727
        %729 = vmatmul.bf16.gmra.mxu0 %v361
        %v730 = vpop.f32.mrf.mxu0
        %v731 = vadd.f32 %v639, %v730
        %v732 = vpop.f32.mrf.mxu0
        %v733 = vadd.f32 %v641, %v732
        %734 = vmatmul.bf16.gmra.mxu0 %v362
        %v735 = vpop.f32.mrf.mxu0
        %v736 = vadd.f32 %v644, %v735
        %v737 = vpop.f32.mrf.mxu0
        %v738 = vadd.f32 %v646, %v737
        %739 = vmatmul.bf16.gmra.mxu0 %v363
        %v740 = vpop.f32.mrf.mxu0
        %v741 = vadd.f32 %v649, %v740
        %v742 = vpop.f32.mrf.mxu0
        %v743 = vadd.f32 %v651, %v742
        %744 = vmatmul.bf16.gmra.mxu0 %v364
        %v745 = vpop.f32.mrf.mxu0
        %v746 = vadd.f32 %v654, %v745
        %v747 = vpop.f32.mrf.mxu0
        %v748 = vadd.f32 %v656, %v747
        %749 = vmatmul.bf16.gmra.mxu0 %v365
        %v750 = vpop.f32.mrf.mxu0
        %v751 = vadd.f32 %v659, %v750
        %v752 = vpop.f32.mrf.mxu0
        %v753 = vadd.f32 %v661, %v752
        %754 = vmatmul.bf16.gmra.mxu0 %v366
        %v755 = vpop.f32.mrf.mxu0
        %v756 = vadd.f32 %v664, %v755
        %v757 = vpop.f32.mrf.mxu0
        %v758 = vadd.f32 %v666, %v757
        %759 = vmatmul.bf16.gmra.mxu0 %v367
        %v760 = vpop.f32.mrf.mxu0
        %v761 = vadd.f32 %v669, %v760
        %v762 = vpop.f32.mrf.mxu0
        %v763 = vadd.f32 %v671, %v762
        %764 = vmatmul.bf16.gmra.mxu0 %v368
        %v765 = vpop.f32.mrf.mxu0
        %v766 = vadd.f32 %v674, %v765
        %v767 = vpop.f32.mrf.mxu0
        %v768 = vadd.f32 %v676, %v767
        %769 = vmatmul.bf16.gmra.mxu0 %v369
        %v770 = vpop.f32.mrf.mxu0
        %v771 = vadd.f32 %v679, %v770
        %v772 = vpop.f32.mrf.mxu0
        %v773 = vadd.f32 %v681, %v772
        %774 = vmatmul.bf16.gmra.mxu0 %v370
        %v775 = vpop.f32.mrf.mxu0
        %v776 = vadd.f32 %v684, %v775
        %v777 = vpop.f32.mrf.mxu0
        %v778 = vadd.f32 %v686, %v777
        %779 = vmatmul.bf16.gmra.mxu0 %v396
        %v780 = vpop.f32.mrf.mxu0
        %v781 = vadd.f32 %v689, %v780
        %v782 = vpop.f32.mrf.mxu0
        %v783 = vadd.f32 %v691, %v782
        %784 = vmatmul.bf16.gmra.mxu0 %v397
        %v785 = vpop.f32.mrf.mxu0
        %v786 = vpop.f32.mrf.mxu0
        %787 = vdwg.mxu0
        %788 = vmatpush.bf16.msra.mxu0 %v579
        %789 = vmatpush.bf16.msra.mxu0 %v578
        %790 = vmatpush.bf16.msra.mxu0 %v577
        %791 = vmatpush.bf16.msra.mxu0 %v576
        %792 = vmatpush.bf16.msra.mxu0 %v575
        %793 = vmatpush.bf16.msra.mxu0 %v574
        %794 = vmatpush.bf16.msra.mxu0 %v573
        %795 = vmatpush.bf16.msra.mxu0 %v572
        %796 = vmatmul.bf16.gmra.mxu0 %v358
        %v797 = vpop.f32.mrf.mxu0
        %v798 = vadd.f32 %v706, %v797
        %v799 = vpop.f32.mrf.mxu0
        %v800 = vadd.f32 %v708, %v799
        %801 = vmatmul.bf16.gmra.mxu0 %v359
        %v802 = vpop.f32.mrf.mxu0
        %v803 = vadd.f32 %v711, %v802
        %v804 = vpop.f32.mrf.mxu0
        %v805 = vadd.f32 %v713, %v804
        %806 = vmatmul.bf16.gmra.mxu0 %v360
        %v807 = vpop.f32.mrf.mxu0
        %v808 = vadd.f32 %v716, %v807
        %v809 = vpop.f32.mrf.mxu0
        %v810 = vadd.f32 %v718, %v809
        %811 = vmatmul.bf16.gmra.mxu0 %v361
        %v812 = vpop.f32.mrf.mxu0
        %v813 = vadd.f32 %v721, %v812
        %v814 = vpop.f32.mrf.mxu0
        %v815 = vadd.f32 %v723, %v814
        %816 = vmatmul.bf16.gmra.mxu0 %v362
        %v817 = vpop.f32.mrf.mxu0
        %v818 = vadd.f32 %v726, %v817
        %v819 = vpop.f32.mrf.mxu0
        %v820 = vadd.f32 %v728, %v819
        %821 = vmatmul.bf16.gmra.mxu0 %v363
        %v822 = vpop.f32.mrf.mxu0
        %v823 = vadd.f32 %v731, %v822
        %v824 = vpop.f32.mrf.mxu0
        %v825 = vadd.f32 %v733, %v824
        %826 = vmatmul.bf16.gmra.mxu0 %v364
        %v827 = vpop.f32.mrf.mxu0
        %v828 = vadd.f32 %v736, %v827
        %v829 = vpop.f32.mrf.mxu0
        %v830 = vadd.f32 %v738, %v829
        %831 = vmatmul.bf16.gmra.mxu0 %v365
        %v832 = vpop.f32.mrf.mxu0
        %v833 = vadd.f32 %v741, %v832
        %v834 = vpop.f32.mrf.mxu0
        %v835 = vadd.f32 %v743, %v834
        %836 = vmatmul.bf16.gmra.mxu0 %v366
        %v837 = vpop.f32.mrf.mxu0
        %v838 = vadd.f32 %v746, %v837
        %v839 = vpop.f32.mrf.mxu0
        %v840 = vadd.f32 %v748, %v839
        %841 = vmatmul.bf16.gmra.mxu0 %v367
        %v842 = vpop.f32.mrf.mxu0
        %v843 = vadd.f32 %v751, %v842
        %v844 = vpop.f32.mrf.mxu0
        %v845 = vadd.f32 %v753, %v844
        %846 = vmatmul.bf16.gmra.mxu0 %v368
        %v847 = vpop.f32.mrf.mxu0
        %v848 = vadd.f32 %v756, %v847
        %v849 = vpop.f32.mrf.mxu0
        %v850 = vadd.f32 %v758, %v849
        %851 = vmatmul.bf16.gmra.mxu0 %v369
        %v852 = vpop.f32.mrf.mxu0
        %v853 = vadd.f32 %v761, %v852
        %v854 = vpop.f32.mrf.mxu0
        %v855 = vadd.f32 %v763, %v854
        %856 = vmatmul.bf16.gmra.mxu0 %v370
        %v857 = vpop.f32.mrf.mxu0
        %v858 = vadd.f32 %v766, %v857
        %v859 = vpop.f32.mrf.mxu0
        %v860 = vadd.f32 %v768, %v859
        %861 = vmatmul.bf16.gmra.mxu0 %v396
        %v862 = vpop.f32.mrf.mxu0
        %v863 = vadd.f32 %v771, %v862
        %v864 = vpop.f32.mrf.mxu0
        %v865 = vadd.f32 %v773, %v864
        %866 = vmatmul.bf16.gmra.mxu0 %v397
        %v867 = vpop.f32.mrf.mxu0
        %v868 = vadd.f32 %v776, %v867
        %v869 = vpop.f32.mrf.mxu0
        %v870 = vadd.f32 %v778, %v869
        %871 = vmatmul.bf16.gmra.mxu0 %v408
        %v872 = vpop.f32.mrf.mxu0
        %v873 = vadd.f32 %v781, %v872
        %v874 = vpop.f32.mrf.mxu0
        %v875 = vadd.f32 %v783, %v874
        %876 = vmatmul.bf16.gmra.mxu0 %v409
        %v877 = vpop.f32.mrf.mxu0
        %v878 = vpop.f32.mrf.mxu0
        %879 = vdwg.mxu0
        %s880 = scalar_lea.vmem [#allocation5], 192
        %v881 = vld [vmem:[%s880] sm:$0xf]
        %v882 = vld [vmem:[%s880 + $0x4] sm:$0xf]
        %v883 = vld [vmem:[%s880 + $0x8] sm:$0xf]
        %v884 = vld [vmem:[%s880 + $0xc] sm:$0xf]
        %v885 = vld [vmem:[%s880 + $0x10] sm:$0xf]
        %v886 = vld [vmem:[%s880 + $0x14] sm:$0xf]
        %v887 = vld [vmem:[%s880 + $0x18] sm:$0xf]
        %v888 = vld [vmem:[%s880 + $0x1c] sm:$0xf]
        %v889 = vld [vmem:[%s880 + $0x20] sm:$0xf]
        %v890 = vld [vmem:[%s880 + $0x24] sm:$0xf]
        %v891 = vld [vmem:[%s880 + $0x28] sm:$0xf]
        %v892 = vld [vmem:[%s880 + $0x2c] sm:$0xf]
        %v893 = vld [vmem:[%s880 + $0x30] sm:$0xf]
        %v894 = vld [vmem:[%s880 + $0x34] sm:$0xf]
        %v895 = vld [vmem:[%s880 + $0x38] sm:$0xf]
        %v896 = vld [vmem:[%s880 + $0x3c] sm:$0xf]
        %v897 = vld [vmem:[%s880 + $0x40] sm:$0xf]
        %v898 = vld [vmem:[%s880 + $0x44] sm:$0xf]
        %v899 = vld [vmem:[%s880 + $0x48] sm:$0xf]
        %v900 = vld [vmem:[%s880 + $0x4c] sm:$0xf]
        %v901 = vld [vmem:[%s880 + $0x50] sm:$0xf]
        %v902 = vld [vmem:[%s880 + $0x54] sm:$0xf]
        %v903 = vld [vmem:[%s880 + $0x58] sm:$0xf]
        %v904 = vld [vmem:[%s880 + $0x5c] sm:$0xf]
        %v905 = vld [vmem:[%s880 + $0x60] sm:$0xf]
        %v906 = vld [vmem:[%s880 + $0x64] sm:$0xf]
        %v907 = vld [vmem:[%s880 + $0x68] sm:$0xf]
        %v908 = vld [vmem:[%s880 + $0x6c] sm:$0xf]
        %v909 = vld [vmem:[%s880 + $0x70] sm:$0xf]
        %v910 = vld [vmem:[%s880 + $0x74] sm:$0xf]
        %v911 = vld [vmem:[%s880 + $0x78] sm:$0xf]
        %v912 = vld [vmem:[%s880 + $0x7c] sm:$0xf]
        %v913 = vld [vmem:[%s880 + $0x80] sm:$0xf]
        %v914 = vld [vmem:[%s880 + $0x84] sm:$0xf]
        %v915 = vld [vmem:[%s880 + $0x88] sm:$0xf]
        %v916 = vld [vmem:[%s880 + $0x8c] sm:$0xf]
        %v917 = vld [vmem:[%s880 + $0x90] sm:$0xf]
        %v918 = vld [vmem:[%s880 + $0x94] sm:$0xf]
        %v919 = vld [vmem:[%s880 + $0x98] sm:$0xf]
        %v920 = vld [vmem:[%s880 + $0x9c] sm:$0xf]
        %v921 = vld [vmem:[%s880 + $0xa0] sm:$0xf]
        %v922 = vld [vmem:[%s880 + $0xa4] sm:$0xf]
        %v923 = vld [vmem:[%s880 + $0xa8] sm:$0xf]
        %v924 = vld [vmem:[%s880 + $0xac] sm:$0xf]
        %v925 = vld [vmem:[%s880 + $0xb0] sm:$0xf]
        %v926 = vld [vmem:[%s880 + $0xb4] sm:$0xf]
        %v927 = vld [vmem:[%s880 + $0xb8] sm:$0xf]
        %v928 = vld [vmem:[%s880 + $0xbc] sm:$0xf]
        %v977 = vunpack.c.l.b16 %v881
        %v978 = vunpack.c.l.b16 %v882
        %v979 = vunpack.c.l.b16 %v883
        %v980 = vunpack.c.l.b16 %v884
        %v981 = vunpack.c.l.b16 %v885
        %v982 = vunpack.c.l.b16 %v886
        %v983 = vunpack.c.l.b16 %v887
        %v984 = vunpack.c.l.b16 %v888
        %v985 = vunpack.c.l.b16 %v889
        %v986 = vunpack.c.l.b16 %v890
        %v987 = vunpack.c.l.b16 %v891
        %v988 = vunpack.c.l.b16 %v892
        %v989 = vunpack.c.l.b16 %v893
        %v990 = vunpack.c.l.b16 %v894
        %v991 = vunpack.c.l.b16 %v895
        %v992 = vunpack.c.l.b16 %v896
        %v993 = vunpack.c.l.b16 %v897
        %v994 = vunpack.c.l.b16 %v898
        %v995 = vunpack.c.l.b16 %v899
        %v996 = vunpack.c.l.b16 %v900
        %v997 = vunpack.c.l.b16 %v901
        %v998 = vunpack.c.l.b16 %v902
        %v999 = vunpack.c.l.b16 %v903
        %v1000 = vunpack.c.l.b16 %v904
        %v1001 = vunpack.c.l.b16 %v905
        %v1002 = vunpack.c.l.b16 %v906
        %v1003 = vunpack.c.l.b16 %v907
        %v1004 = vunpack.c.l.b16 %v908
        %v1005 = vunpack.c.l.b16 %v909
        %v1006 = vunpack.c.l.b16 %v910
        %v1007 = vunpack.c.l.b16 %v911
        %v1008 = vunpack.c.l.b16 %v912
        %v1009 = vunpack.c.l.b16 %v913
        %v1010 = vunpack.c.l.b16 %v914
        %v1011 = vunpack.c.l.b16 %v915
        %v1012 = vunpack.c.l.b16 %v916
        %v1013 = vunpack.c.l.b16 %v917
        %v1014 = vunpack.c.l.b16 %v918
        %v1015 = vunpack.c.l.b16 %v919
        %v1016 = vunpack.c.l.b16 %v920
        %v1017 = vunpack.c.l.b16 %v921
        %v1018 = vunpack.c.l.b16 %v922
        %v1019 = vunpack.c.l.b16 %v923
        %v1020 = vunpack.c.l.b16 %v924
        %v1021 = vunpack.c.l.b16 %v925
        %v1022 = vunpack.c.l.b16 %v926
        %v1023 = vunpack.c.l.b16 %v927
        %v1024 = vunpack.c.l.b16 %v928
        %v1025 = vpack.c.b16 %v978, %v977
        %v1026 = vpack.c.b16 %v980, %v979
        %v1027 = vpack.c.b16 %v982, %v981
        %v1028 = vpack.c.b16 %v984, %v983
        %v1029 = vpack.c.b16 %v986, %v985
        %v1030 = vpack.c.b16 %v988, %v987
        %v1031 = vpack.c.b16 %v990, %v989
        %v1032 = vpack.c.b16 %v992, %v991
        %v1033 = vpack.c.b16 %v994, %v993
        %v1034 = vpack.c.b16 %v996, %v995
        %v1035 = vpack.c.b16 %v998, %v997
        %v1036 = vpack.c.b16 %v1000, %v999
        %v1037 = vpack.c.b16 %v1002, %v1001
        %v1038 = vpack.c.b16 %v1004, %v1003
        %v1039 = vpack.c.b16 %v1006, %v1005
        %v1040 = vpack.c.b16 %v1008, %v1007
        %v1041 = vpack.c.b16 %v1010, %v1009
        %v1042 = vpack.c.b16 %v1012, %v1011
        %v1043 = vpack.c.b16 %v1014, %v1013
        %v1044 = vpack.c.b16 %v1016, %v1015
        %v1045 = vpack.c.b16 %v1018, %v1017
        %v1046 = vpack.c.b16 %v1020, %v1019
        %v1047 = vpack.c.b16 %v1022, %v1021
        %v1048 = vpack.c.b16 %v1024, %v1023
        %1073 = vmatpush.bf16.msra.mxu0 %v1032
        %1074 = vmatpush.bf16.msra.mxu0 %v1031
        %1075 = vmatpush.bf16.msra.mxu0 %v1030
        %1076 = vmatpush.bf16.msra.mxu0 %v1029
        %1077 = vmatpush.bf16.msra.mxu0 %v1028
        %1078 = vmatpush.bf16.msra.mxu0 %v1027
        %1079 = vmatpush.bf16.msra.mxu0 %v1026
        %1080 = vmatpush.bf16.msra.mxu0 %v1025
        %1081 = vmatmul.bf16.gmra.mxu0 %v354
        %v1082 = vpop.f32.mrf.mxu0
        %v1083 = vadd.f32 0.0, %v1082
        %v1084 = vpop.f32.mrf.mxu0
        %v1085 = vadd.f32 0.0, %v1084
        %1086 = vmatmul.bf16.gmra.mxu0 %v355
        %v1087 = vpop.f32.mrf.mxu0
        %v1088 = vadd.f32 0.0, %v1087
        %v1089 = vpop.f32.mrf.mxu0
        %v1090 = vadd.f32 0.0, %v1089
        %1091 = vmatmul.bf16.gmra.mxu0 %v356
        %v1092 = vpop.f32.mrf.mxu0
        %v1093 = vadd.f32 0.0, %v1092
        %v1094 = vpop.f32.mrf.mxu0
        %v1095 = vadd.f32 0.0, %v1094
        %1096 = vmatmul.bf16.gmra.mxu0 %v357
        %v1097 = vpop.f32.mrf.mxu0
        %v1098 = vadd.f32 0.0, %v1097
        %v1099 = vpop.f32.mrf.mxu0
        %v1100 = vadd.f32 0.0, %v1099
        %1101 = vmatmul.bf16.gmra.mxu0 %v358
        %v1102 = vpop.f32.mrf.mxu0
        %v1103 = vadd.f32 0.0, %v1102
        %v1104 = vpop.f32.mrf.mxu0
        %v1105 = vadd.f32 0.0, %v1104
        %1106 = vmatmul.bf16.gmra.mxu0 %v359
        %v1107 = vpop.f32.mrf.mxu0
        %v1108 = vadd.f32 0.0, %v1107
        %v1109 = vpop.f32.mrf.mxu0
        %v1110 = vadd.f32 0.0, %v1109
        %1111 = vmatmul.bf16.gmra.mxu0 %v360
        %v1112 = vpop.f32.mrf.mxu0
        %v1113 = vadd.f32 0.0, %v1112
        %v1114 = vpop.f32.mrf.mxu0
        %v1115 = vadd.f32 0.0, %v1114
        %1116 = vmatmul.bf16.gmra.mxu0 %v361
        %v1117 = vpop.f32.mrf.mxu0
        %v1118 = vadd.f32 0.0, %v1117
        %v1119 = vpop.f32.mrf.mxu0
        %v1120 = vadd.f32 0.0, %v1119
        %1121 = vmatmul.bf16.gmra.mxu0 %v362
        %v1122 = vpop.f32.mrf.mxu0
        %v1123 = vadd.f32 0.0, %v1122
        %v1124 = vpop.f32.mrf.mxu0
        %v1125 = vadd.f32 0.0, %v1124
        %1126 = vmatmul.bf16.gmra.mxu0 %v363
        %v1127 = vpop.f32.mrf.mxu0
        %v1128 = vadd.f32 0.0, %v1127
        %v1129 = vpop.f32.mrf.mxu0
        %v1130 = vadd.f32 0.0, %v1129
        %1131 = vmatmul.bf16.gmra.mxu0 %v364
        %v1132 = vpop.f32.mrf.mxu0
        %v1133 = vadd.f32 0.0, %v1132
        %v1134 = vpop.f32.mrf.mxu0
        %v1135 = vadd.f32 0.0, %v1134
        %1136 = vmatmul.bf16.gmra.mxu0 %v365
        %v1137 = vpop.f32.mrf.mxu0
        %v1138 = vadd.f32 0.0, %v1137
        %v1139 = vpop.f32.mrf.mxu0
        %v1140 = vadd.f32 0.0, %v1139
        %1141 = vmatmul.bf16.gmra.mxu0 %v366
        %v1142 = vpop.f32.mrf.mxu0
        %v1143 = vadd.f32 0.0, %v1142
        %v1144 = vpop.f32.mrf.mxu0
        %v1145 = vadd.f32 0.0, %v1144
        %1146 = vmatmul.bf16.gmra.mxu0 %v367
        %v1147 = vpop.f32.mrf.mxu0
        %v1148 = vadd.f32 0.0, %v1147
        %v1149 = vpop.f32.mrf.mxu0
        %v1150 = vadd.f32 0.0, %v1149
        %1151 = vmatmul.bf16.gmra.mxu0 %v368
        %v1152 = vpop.f32.mrf.mxu0
        %v1153 = vadd.f32 0.0, %v1152
        %v1154 = vpop.f32.mrf.mxu0
        %v1155 = vadd.f32 0.0, %v1154
        %1156 = vmatmul.bf16.gmra.mxu0 %v369
        %v1157 = vpop.f32.mrf.mxu0
        %v1158 = vadd.f32 0.0, %v1157
        %v1159 = vpop.f32.mrf.mxu0
        %v1160 = vadd.f32 0.0, %v1159
        %1161 = vmatmul.bf16.gmra.mxu0 %v370
        %v1162 = vpop.f32.mrf.mxu0
        %v1163 = vadd.f32 0.0, %v1162
        %v1164 = vpop.f32.mrf.mxu0
        %1165 = vdwg.mxu0
        %1166 = vmatpush.bf16.msra.mxu0 %v1040
        %1167 = vmatpush.bf16.msra.mxu0 %v1039
        %1168 = vmatpush.bf16.msra.mxu0 %v1038
        %1169 = vmatpush.bf16.msra.mxu0 %v1037
        %1170 = vmatpush.bf16.msra.mxu0 %v1036
        %1171 = vmatpush.bf16.msra.mxu0 %v1035
        %1172 = vmatpush.bf16.msra.mxu0 %v1034
        %1173 = vmatpush.bf16.msra.mxu0 %v1033
        %1174 = vmatmul.bf16.gmra.mxu0 %v356
        %v1175 = vpop.f32.mrf.mxu0
        %v1176 = vadd.f32 %v1083, %v1175
        %v1177 = vpop.f32.mrf.mxu0
        %v1178 = vadd.f32 %v1085, %v1177
        %1179 = vmatmul.bf16.gmra.mxu0 %v357
        %v1180 = vpop.f32.mrf.mxu0
        %v1181 = vadd.f32 %v1088, %v1180
        %v1182 = vpop.f32.mrf.mxu0
        %v1183 = vadd.f32 %v1090, %v1182
        %1184 = vmatmul.bf16.gmra.mxu0 %v358
        %v1185 = vpop.f32.mrf.mxu0
        %v1186 = vadd.f32 %v1093, %v1185
        %v1187 = vpop.f32.mrf.mxu0
        %v1188 = vadd.f32 %v1095, %v1187
        %1189 = vmatmul.bf16.gmra.mxu0 %v359
        %v1190 = vpop.f32.mrf.mxu0
        %v1191 = vadd.f32 %v1098, %v1190
        %v1192 = vpop.f32.mrf.mxu0
        %v1193 = vadd.f32 %v1100, %v1192
        %1194 = vmatmul.bf16.gmra.mxu0 %v360
        %v1195 = vpop.f32.mrf.mxu0
        %v1196 = vadd.f32 %v1103, %v1195
        %v1197 = vpop.f32.mrf.mxu0
        %v1198 = vadd.f32 %v1105, %v1197
        %1199 = vmatmul.bf16.gmra.mxu0 %v361
        %v1200 = vpop.f32.mrf.mxu0
        %v1201 = vadd.f32 %v1108, %v1200
        %v1202 = vpop.f32.mrf.mxu0
        %v1203 = vadd.f32 %v1110, %v1202
        %1204 = vmatmul.bf16.gmra.mxu0 %v362
        %v1205 = vpop.f32.mrf.mxu0
        %v1206 = vadd.f32 %v1113, %v1205
        %v1207 = vpop.f32.mrf.mxu0
        %v1208 = vadd.f32 %v1115, %v1207
        %1209 = vmatmul.bf16.gmra.mxu0 %v363
        %v1210 = vpop.f32.mrf.mxu0
        %v1211 = vadd.f32 %v1118, %v1210
        %v1212 = vpop.f32.mrf.mxu0
        %v1213 = vadd.f32 %v1120, %v1212
        %1214 = vmatmul.bf16.gmra.mxu0 %v364
        %v1215 = vpop.f32.mrf.mxu0
        %v1216 = vadd.f32 %v1123, %v1215
        %v1217 = vpop.f32.mrf.mxu0
        %v1218 = vadd.f32 %v1125, %v1217
        %1219 = vmatmul.bf16.gmra.mxu0 %v365
        %v1220 = vpop.f32.mrf.mxu0
        %v1221 = vadd.f32 %v1128, %v1220
        %v1222 = vpop.f32.mrf.mxu0
        %v1223 = vadd.f32 %v1130, %v1222
        %1224 = vmatmul.bf16.gmra.mxu0 %v366
        %v1225 = vpop.f32.mrf.mxu0
        %v1226 = vadd.f32 %v1133, %v1225
        %v1227 = vpop.f32.mrf.mxu0
        %v1228 = vadd.f32 %v1135, %v1227
        %1229 = vmatmul.bf16.gmra.mxu0 %v367
        %v1230 = vpop.f32.mrf.mxu0
        %v1231 = vadd.f32 %v1138, %v1230
        %v1232 = vpop.f32.mrf.mxu0
        %v1233 = vadd.f32 %v1140, %v1232
        %1234 = vmatmul.bf16.gmra.mxu0 %v368
        %v1235 = vpop.f32.mrf.mxu0
        %v1236 = vadd.f32 %v1143, %v1235
        %v1237 = vpop.f32.mrf.mxu0
        %v1238 = vadd.f32 %v1145, %v1237
        %1239 = vmatmul.bf16.gmra.mxu0 %v369
        %v1240 = vpop.f32.mrf.mxu0
        %v1241 = vadd.f32 %v1148, %v1240
        %v1242 = vpop.f32.mrf.mxu0
        %v1243 = vadd.f32 %v1150, %v1242
        %1244 = vmatmul.bf16.gmra.mxu0 %v370
        %v1245 = vpop.f32.mrf.mxu0
        %v1246 = vadd.f32 %v1153, %v1245
        %v1247 = vpop.f32.mrf.mxu0
        %v1248 = vadd.f32 %v1155, %v1247
        %1249 = vmatmul.bf16.gmra.mxu0 %v396
        %v1250 = vpop.f32.mrf.mxu0
        %v1251 = vadd.f32 %v1158, %v1250
        %v1252 = vpop.f32.mrf.mxu0
        %v1253 = vadd.f32 %v1160, %v1252
        %1254 = vmatmul.bf16.gmra.mxu0 %v397
        %v1255 = vpop.f32.mrf.mxu0
        %v1256 = vadd.f32 %v1163, %v1255
        %v1257 = vpop.f32.mrf.mxu0
        %1258 = vdwg.mxu0
        %1259 = vmatpush.bf16.msra.mxu0 %v1048
        %1260 = vmatpush.bf16.msra.mxu0 %v1047
        %1261 = vmatpush.bf16.msra.mxu0 %v1046
        %1262 = vmatpush.bf16.msra.mxu0 %v1045
        %1263 = vmatpush.bf16.msra.mxu0 %v1044
        %1264 = vmatpush.bf16.msra.mxu0 %v1043
        %1265 = vmatpush.bf16.msra.mxu0 %v1042
        %1266 = vmatpush.bf16.msra.mxu0 %v1041
        %1267 = vmatmul.bf16.gmra.mxu0 %v358
        %v1268 = vpop.f32.mrf.mxu0
        %v1269 = vadd.f32 %v1176, %v1268
        %v1270 = vpop.f32.mrf.mxu0
        %v1271 = vadd.f32 %v1178, %v1270
        %1272 = vmatmul.bf16.gmra.mxu0 %v359
        %v1273 = vpop.f32.mrf.mxu0
        %v1274 = vadd.f32 %v1181, %v1273
        %v1275 = vpop.f32.mrf.mxu0
        %v1276 = vadd.f32 %v1183, %v1275
        %1277 = vmatmul.bf16.gmra.mxu0 %v360
        %v1278 = vpop.f32.mrf.mxu0
        %v1279 = vadd.f32 %v1186, %v1278
        %v1280 = vpop.f32.mrf.mxu0
        %v1281 = vadd.f32 %v1188, %v1280
        %1282 = vmatmul.bf16.gmra.mxu0 %v361
        %v1283 = vpop.f32.mrf.mxu0
        %v1284 = vadd.f32 %v1191, %v1283
        %v1285 = vpop.f32.mrf.mxu0
        %v1286 = vadd.f32 %v1193, %v1285
        %1287 = vmatmul.bf16.gmra.mxu0 %v362
        %v1288 = vpop.f32.mrf.mxu0
        %v1289 = vadd.f32 %v1196, %v1288
        %v1290 = vpop.f32.mrf.mxu0
        %v1291 = vadd.f32 %v1198, %v1290
        %1292 = vmatmul.bf16.gmra.mxu0 %v363
        %v1293 = vpop.f32.mrf.mxu0
        %v1294 = vadd.f32 %v1201, %v1293
        %v1295 = vpop.f32.mrf.mxu0
        %v1296 = vadd.f32 %v1203, %v1295
        %1297 = vmatmul.bf16.gmra.mxu0 %v364
        %v1298 = vpop.f32.mrf.mxu0
        %v1299 = vadd.f32 %v1206, %v1298
        %v1300 = vpop.f32.mrf.mxu0
        %v1301 = vadd.f32 %v1208, %v1300
        %1302 = vmatmul.bf16.gmra.mxu0 %v365
        %v1303 = vpop.f32.mrf.mxu0
        %v1304 = vadd.f32 %v1211, %v1303
        %v1305 = vpop.f32.mrf.mxu0
        %v1306 = vadd.f32 %v1213, %v1305
        %1307 = vmatmul.bf16.gmra.mxu0 %v366
        %v1308 = vpop.f32.mrf.mxu0
        %v1309 = vadd.f32 %v1216, %v1308
        %v1310 = vpop.f32.mrf.mxu0
        %v1311 = vadd.f32 %v1218, %v1310
        %1312 = vmatmul.bf16.gmra.mxu0 %v367
        %v1313 = vpop.f32.mrf.mxu0
        %v1314 = vadd.f32 %v1221, %v1313
        %v1315 = vpop.f32.mrf.mxu0
        %v1316 = vadd.f32 %v1223, %v1315
        %1317 = vmatmul.bf16.gmra.mxu0 %v368
        %v1318 = vpop.f32.mrf.mxu0
        %v1319 = vadd.f32 %v1226, %v1318
        %v1320 = vpop.f32.mrf.mxu0
        %v1321 = vadd.f32 %v1228, %v1320
        %1322 = vmatmul.bf16.gmra.mxu0 %v369
        %v1323 = vpop.f32.mrf.mxu0
        %v1324 = vadd.f32 %v1231, %v1323
        %v1325 = vpop.f32.mrf.mxu0
        %v1326 = vadd.f32 %v1233, %v1325
        %1327 = vmatmul.bf16.gmra.mxu0 %v370
        %v1328 = vpop.f32.mrf.mxu0
        %v1329 = vadd.f32 %v1236, %v1328
        %v1330 = vpop.f32.mrf.mxu0
        %v1331 = vadd.f32 %v1238, %v1330
        %1332 = vmatmul.bf16.gmra.mxu0 %v396
        %v1333 = vpop.f32.mrf.mxu0
        %v1334 = vadd.f32 %v1241, %v1333
        %v1335 = vpop.f32.mrf.mxu0
        %v1336 = vadd.f32 %v1243, %v1335
        %1337 = vmatmul.bf16.gmra.mxu0 %v397
        %v1338 = vpop.f32.mrf.mxu0
        %v1339 = vadd.f32 %v1246, %v1338
        %v1340 = vpop.f32.mrf.mxu0
        %v1341 = vadd.f32 %v1248, %v1340
        %1342 = vmatmul.bf16.gmra.mxu0 %v408
        %v1343 = vpop.f32.mrf.mxu0
        %v1344 = vadd.f32 %v1251, %v1343
        %v1345 = vpop.f32.mrf.mxu0
        %v1346 = vadd.f32 %v1253, %v1345
        %1347 = vmatmul.bf16.gmra.mxu0 %v409
        %v1348 = vpop.f32.mrf.mxu0
        %v1349 = vadd.f32 %v1256, %v1348
        %v1350 = vpop.f32.mrf.mxu0
        %1351 = vdwg.mxu0
        %vm1385 = vcmask 1046528
        %v1386 = vrot.slane %v1269, 1
        %v1387 = vrot.slane %v1271, 1
        %v1388 = vsel %vm1385, %v1386, %v1387
        %v1389 = vrot.slane %v1274, 1
        %v1390 = vsel %vm1385, %v1387, %v1389
        %v1391 = vrot.slane %v1276, 1
        %v1392 = vsel %vm1385, %v1389, %v1391
        %v1393 = vrot.slane %v1279, 1
        %v1394 = vsel %vm1385, %v1391, %v1393
        %v1395 = vrot.slane %v1281, 1
        %v1396 = vsel %vm1385, %v1393, %v1395
        %v1397 = vrot.slane %v1284, 1
        %v1398 = vsel %vm1385, %v1395, %v1397
        %v1399 = vrot.slane %v1286, 1
        %v1400 = vsel %vm1385, %v1397, %v1399
        %v1401 = vrot.slane %v1289, 1
        %v1402 = vsel %vm1385, %v1399, %v1401
        %v1403 = vrot.slane %v1291, 1
        %v1404 = vsel %vm1385, %v1401, %v1403
        %v1405 = vrot.slane %v1294, 1
        %v1406 = vsel %vm1385, %v1403, %v1405
        %v1407 = vrot.slane %v1296, 1
        %v1408 = vsel %vm1385, %v1405, %v1407
        %v1409 = vrot.slane %v1299, 1
        %v1410 = vsel %vm1385, %v1407, %v1409
        %v1411 = vrot.slane %v1301, 1
        %v1412 = vsel %vm1385, %v1409, %v1411
        %v1413 = vrot.slane %v1304, 1
        %v1414 = vsel %vm1385, %v1411, %v1413
        %v1415 = vrot.slane %v1306, 1
        %v1416 = vsel %vm1385, %v1413, %v1415
        %v1417 = vrot.slane %v1309, 1
        %v1418 = vsel %vm1385, %v1415, %v1417
        %v1419 = vrot.slane %v1311, 1
        %v1420 = vsel %vm1385, %v1417, %v1419
        %v1421 = vrot.slane %v1314, 1
        %v1422 = vsel %vm1385, %v1419, %v1421
        %v1423 = vrot.slane %v1316, 1
        %v1424 = vsel %vm1385, %v1421, %v1423
        %v1425 = vrot.slane %v1319, 1
        %v1426 = vsel %vm1385, %v1423, %v1425
        %v1427 = vrot.slane %v1321, 1
        %v1428 = vsel %vm1385, %v1425, %v1427
        %v1429 = vrot.slane %v1324, 1
        %v1430 = vsel %vm1385, %v1427, %v1429
        %v1431 = vrot.slane %v1326, 1
        %v1432 = vsel %vm1385, %v1429, %v1431
        %v1433 = vrot.slane %v1329, 1
        %v1434 = vsel %vm1385, %v1431, %v1433
        %v1435 = vrot.slane %v1331, 1
        %v1436 = vsel %vm1385, %v1433, %v1435
        %v1437 = vrot.slane %v1334, 1
        %v1438 = vsel %vm1385, %v1435, %v1437
        %v1439 = vrot.slane %v1336, 1
        %v1440 = vsel %vm1385, %v1437, %v1439
        %v1441 = vrot.slane %v1339, 1
        %v1442 = vsel %vm1385, %v1439, %v1441
        %v1443 = vrot.slane %v1341, 1
        %v1444 = vsel %vm1385, %v1441, %v1443
        %v1445 = vrot.slane %v1344, 1
        %v1446 = vsel %vm1385, %v1443, %v1445
        %v1447 = vrot.slane %v1346, 1
        %v1448 = vsel %vm1385, %v1445, %v1447
        %v1449 = vrot.slane %v1349, 1
        %v1450 = vsel %vm1385, %v1447, %v1449
        %v1483 = vadd.f32 %v798, %v1388
        %v1484 = vadd.f32 %v800, %v1390
        %v1485 = vadd.f32 %v803, %v1392
        %v1486 = vadd.f32 %v805, %v1394
        %v1487 = vadd.f32 %v808, %v1396
        %v1488 = vadd.f32 %v810, %v1398
        %v1489 = vadd.f32 %v813, %v1400
        %v1490 = vadd.f32 %v815, %v1402
        %v1491 = vadd.f32 %v818, %v1404
        %v1492 = vadd.f32 %v820, %v1406
        %v1493 = vadd.f32 %v823, %v1408
        %v1494 = vadd.f32 %v825, %v1410
        %v1495 = vadd.f32 %v828, %v1412
        %v1496 = vadd.f32 %v830, %v1414
        %v1497 = vadd.f32 %v833, %v1416
        %v1498 = vadd.f32 %v835, %v1418
        %v1499 = vadd.f32 %v838, %v1420
        %v1500 = vadd.f32 %v840, %v1422
        %v1501 = vadd.f32 %v843, %v1424
        %v1502 = vadd.f32 %v845, %v1426
        %v1503 = vadd.f32 %v848, %v1428
        %v1504 = vadd.f32 %v850, %v1430
        %v1505 = vadd.f32 %v853, %v1432
        %v1506 = vadd.f32 %v855, %v1434
        %v1507 = vadd.f32 %v858, %v1436
        %v1508 = vadd.f32 %v860, %v1438
        %v1509 = vadd.f32 %v863, %v1440
        %v1510 = vadd.f32 %v865, %v1442
        %v1511 = vadd.f32 %v868, %v1444
        %v1512 = vadd.f32 %v870, %v1446
        %v1513 = vadd.f32 %v873, %v1448
        %v1514 = vadd.f32 %v875, %v1450
        %s1515 = scalar_lea.vmem [#allocation5], 384
        %v1516 = vld [vmem:[%s1515] sm:$0xf]
        %v1517 = vld [vmem:[%s1515 + $0x4] sm:$0xf]
        %v1518 = vld [vmem:[%s1515 + $0x8] sm:$0xf]
        %v1519 = vld [vmem:[%s1515 + $0xc] sm:$0xf]
        %v1520 = vld [vmem:[%s1515 + $0x10] sm:$0xf]
        %v1521 = vld [vmem:[%s1515 + $0x14] sm:$0xf]
        %v1522 = vld [vmem:[%s1515 + $0x18] sm:$0xf]
        %v1523 = vld [vmem:[%s1515 + $0x1c] sm:$0xf]
        %v1524 = vld [vmem:[%s1515 + $0x20] sm:$0xf]
        %v1525 = vld [vmem:[%s1515 + $0x24] sm:$0xf]
        %v1526 = vld [vmem:[%s1515 + $0x28] sm:$0xf]
        %v1527 = vld [vmem:[%s1515 + $0x2c] sm:$0xf]
        %v1528 = vld [vmem:[%s1515 + $0x30] sm:$0xf]
        %v1529 = vld [vmem:[%s1515 + $0x34] sm:$0xf]
        %v1530 = vld [vmem:[%s1515 + $0x38] sm:$0xf]
        %v1531 = vld [vmem:[%s1515 + $0x3c] sm:$0xf]
        %v1532 = vld [vmem:[%s1515 + $0x40] sm:$0xf]
        %v1533 = vld [vmem:[%s1515 + $0x44] sm:$0xf]
        %v1534 = vld [vmem:[%s1515 + $0x48] sm:$0xf]
        %v1535 = vld [vmem:[%s1515 + $0x4c] sm:$0xf]
        %v1536 = vld [vmem:[%s1515 + $0x50] sm:$0xf]
        %v1537 = vld [vmem:[%s1515 + $0x54] sm:$0xf]
        %v1538 = vld [vmem:[%s1515 + $0x58] sm:$0xf]
        %v1539 = vld [vmem:[%s1515 + $0x5c] sm:$0xf]
        %v1540 = vld [vmem:[%s1515 + $0x60] sm:$0xf]
        %v1541 = vld [vmem:[%s1515 + $0x64] sm:$0xf]
        %v1542 = vld [vmem:[%s1515 + $0x68] sm:$0xf]
        %v1543 = vld [vmem:[%s1515 + $0x6c] sm:$0xf]
        %v1544 = vld [vmem:[%s1515 + $0x70] sm:$0xf]
        %v1545 = vld [vmem:[%s1515 + $0x74] sm:$0xf]
        %v1546 = vld [vmem:[%s1515 + $0x78] sm:$0xf]
        %v1547 = vld [vmem:[%s1515 + $0x7c] sm:$0xf]
        %v1548 = vld [vmem:[%s1515 + $0x80] sm:$0xf]
        %v1549 = vld [vmem:[%s1515 + $0x84] sm:$0xf]
        %v1550 = vld [vmem:[%s1515 + $0x88] sm:$0xf]
        %v1551 = vld [vmem:[%s1515 + $0x8c] sm:$0xf]
        %v1552 = vld [vmem:[%s1515 + $0x90] sm:$0xf]
        %v1553 = vld [vmem:[%s1515 + $0x94] sm:$0xf]
        %v1554 = vld [vmem:[%s1515 + $0x98] sm:$0xf]
        %v1555 = vld [vmem:[%s1515 + $0x9c] sm:$0xf]
        %v1556 = vld [vmem:[%s1515 + $0xa0] sm:$0xf]
        %v1557 = vld [vmem:[%s1515 + $0xa4] sm:$0xf]
        %v1558 = vld [vmem:[%s1515 + $0xa8] sm:$0xf]
        %v1559 = vld [vmem:[%s1515 + $0xac] sm:$0xf]
        %v1560 = vld [vmem:[%s1515 + $0xb0] sm:$0xf]
        %v1561 = vld [vmem:[%s1515 + $0xb4] sm:$0xf]
        %v1562 = vld [vmem:[%s1515 + $0xb8] sm:$0xf]
        %v1563 = vld [vmem:[%s1515 + $0xbc] sm:$0xf]
        %v1612 = vunpack.c.l.b16 %v1516
        %v1613 = vunpack.c.l.b16 %v1517
        %v1614 = vunpack.c.l.b16 %v1518
        %v1615 = vunpack.c.l.b16 %v1519
        %v1616 = vunpack.c.l.b16 %v1520
        %v1617 = vunpack.c.l.b16 %v1521
        %v1618 = vunpack.c.l.b16 %v1522
        %v1619 = vunpack.c.l.b16 %v1523
        %v1620 = vunpack.c.l.b16 %v1524
        %v1621 = vunpack.c.l.b16 %v1525
        %v1622 = vunpack.c.l.b16 %v1526
        %v1623 = vunpack.c.l.b16 %v1527
        %v1624 = vunpack.c.l.b16 %v1528
        %v1625 = vunpack.c.l.b16 %v1529
        %v1626 = vunpack.c.l.b16 %v1530
        %v1627 = vunpack.c.l.b16 %v1531
        %v1628 = vunpack.c.l.b16 %v1532
        %v1629 = vunpack.c.l.b16 %v1533
        %v1630 = vunpack.c.l.b16 %v1534
        %v1631 = vunpack.c.l.b16 %v1535
        %v1632 = vunpack.c.l.b16 %v1536
        %v1633 = vunpack.c.l.b16 %v1537
        %v1634 = vunpack.c.l.b16 %v1538
        %v1635 = vunpack.c.l.b16 %v1539
        %v1636 = vunpack.c.l.b16 %v1540
        %v1637 = vunpack.c.l.b16 %v1541
        %v1638 = vunpack.c.l.b16 %v1542
        %v1639 = vunpack.c.l.b16 %v1543
        %v1640 = vunpack.c.l.b16 %v1544
        %v1641 = vunpack.c.l.b16 %v1545
        %v1642 = vunpack.c.l.b16 %v1546
        %v1643 = vunpack.c.l.b16 %v1547
        %v1644 = vunpack.c.l.b16 %v1548
        %v1645 = vunpack.c.l.b16 %v1549
        %v1646 = vunpack.c.l.b16 %v1550
        %v1647 = vunpack.c.l.b16 %v1551
        %v1648 = vunpack.c.l.b16 %v1552
        %v1649 = vunpack.c.l.b16 %v1553
        %v1650 = vunpack.c.l.b16 %v1554
        %v1651 = vunpack.c.l.b16 %v1555
        %v1652 = vunpack.c.l.b16 %v1556
        %v1653 = vunpack.c.l.b16 %v1557
        %v1654 = vunpack.c.l.b16 %v1558
        %v1655 = vunpack.c.l.b16 %v1559
        %v1656 = vunpack.c.l.b16 %v1560
        %v1657 = vunpack.c.l.b16 %v1561
        %v1658 = vunpack.c.l.b16 %v1562
        %v1659 = vunpack.c.l.b16 %v1563
        %v1660 = vpack.c.b16 %v1613, %v1612
        %v1661 = vpack.c.b16 %v1615, %v1614
        %v1662 = vpack.c.b16 %v1617, %v1616
        %v1663 = vpack.c.b16 %v1619, %v1618
        %v1664 = vpack.c.b16 %v1621, %v1620
        %v1665 = vpack.c.b16 %v1623, %v1622
        %v1666 = vpack.c.b16 %v1625, %v1624
        %v1667 = vpack.c.b16 %v1627, %v1626
        %v1668 = vpack.c.b16 %v1629, %v1628
        %v1669 = vpack.c.b16 %v1631, %v1630
        %v1670 = vpack.c.b16 %v1633, %v1632
        %v1671 = vpack.c.b16 %v1635, %v1634
        %v1672 = vpack.c.b16 %v1637, %v1636
        %v1673 = vpack.c.b16 %v1639, %v1638
        %v1674 = vpack.c.b16 %v1641, %v1640
        %v1675 = vpack.c.b16 %v1643, %v1642
        %v1676 = vpack.c.b16 %v1645, %v1644
        %v1677 = vpack.c.b16 %v1647, %v1646
        %v1678 = vpack.c.b16 %v1649, %v1648
        %v1679 = vpack.c.b16 %v1651, %v1650
        %v1680 = vpack.c.b16 %v1653, %v1652
        %v1681 = vpack.c.b16 %v1655, %v1654
        %v1682 = vpack.c.b16 %v1657, %v1656
        %v1683 = vpack.c.b16 %v1659, %v1658
        %1708 = vmatpush.bf16.msra.mxu0 %v1667
        %1709 = vmatpush.bf16.msra.mxu0 %v1666
        %1710 = vmatpush.bf16.msra.mxu0 %v1665
        %1711 = vmatpush.bf16.msra.mxu0 %v1664
        %1712 = vmatpush.bf16.msra.mxu0 %v1663
        %1713 = vmatpush.bf16.msra.mxu0 %v1662
        %1714 = vmatpush.bf16.msra.mxu0 %v1661
        %1715 = vmatpush.bf16.msra.mxu0 %v1660
        %1716 = vmatmul.bf16.gmra.mxu0 %v354
        %v1717 = vpop.f32.mrf.mxu0
        %v1718 = vadd.f32 0.0, %v1717
        %v1719 = vpop.f32.mrf.mxu0
        %v1720 = vadd.f32 0.0, %v1719
        %1721 = vmatmul.bf16.gmra.mxu0 %v355
        %v1722 = vpop.f32.mrf.mxu0
        %v1723 = vadd.f32 0.0, %v1722
        %v1724 = vpop.f32.mrf.mxu0
        %v1725 = vadd.f32 0.0, %v1724
        %1726 = vmatmul.bf16.gmra.mxu0 %v356
        %v1727 = vpop.f32.mrf.mxu0
        %v1728 = vadd.f32 0.0, %v1727
        %v1729 = vpop.f32.mrf.mxu0
        %v1730 = vadd.f32 0.0, %v1729
        %1731 = vmatmul.bf16.gmra.mxu0 %v357
        %v1732 = vpop.f32.mrf.mxu0
        %v1733 = vadd.f32 0.0, %v1732
        %v1734 = vpop.f32.mrf.mxu0
        %v1735 = vadd.f32 0.0, %v1734
        %1736 = vmatmul.bf16.gmra.mxu0 %v358
        %v1737 = vpop.f32.mrf.mxu0
        %v1738 = vadd.f32 0.0, %v1737
        %v1739 = vpop.f32.mrf.mxu0
        %v1740 = vadd.f32 0.0, %v1739
        %1741 = vmatmul.bf16.gmra.mxu0 %v359
        %v1742 = vpop.f32.mrf.mxu0
        %v1743 = vadd.f32 0.0, %v1742
        %v1744 = vpop.f32.mrf.mxu0
        %v1745 = vadd.f32 0.0, %v1744
        %1746 = vmatmul.bf16.gmra.mxu0 %v360
        %v1747 = vpop.f32.mrf.mxu0
        %v1748 = vadd.f32 0.0, %v1747
        %v1749 = vpop.f32.mrf.mxu0
        %v1750 = vadd.f32 0.0, %v1749
        %1751 = vmatmul.bf16.gmra.mxu0 %v361
        %v1752 = vpop.f32.mrf.mxu0
        %v1753 = vadd.f32 0.0, %v1752
        %v1754 = vpop.f32.mrf.mxu0
        %v1755 = vadd.f32 0.0, %v1754
        %1756 = vmatmul.bf16.gmra.mxu0 %v362
        %v1757 = vpop.f32.mrf.mxu0
        %v1758 = vadd.f32 0.0, %v1757
        %v1759 = vpop.f32.mrf.mxu0
        %v1760 = vadd.f32 0.0, %v1759
        %1761 = vmatmul.bf16.gmra.mxu0 %v363
        %v1762 = vpop.f32.mrf.mxu0
        %v1763 = vadd.f32 0.0, %v1762
        %v1764 = vpop.f32.mrf.mxu0
        %v1765 = vadd.f32 0.0, %v1764
        %1766 = vmatmul.bf16.gmra.mxu0 %v364
        %v1767 = vpop.f32.mrf.mxu0
        %v1768 = vadd.f32 0.0, %v1767
        %v1769 = vpop.f32.mrf.mxu0
        %v1770 = vadd.f32 0.0, %v1769
        %1771 = vmatmul.bf16.gmra.mxu0 %v365
        %v1772 = vpop.f32.mrf.mxu0
        %v1773 = vadd.f32 0.0, %v1772
        %v1774 = vpop.f32.mrf.mxu0
        %v1775 = vadd.f32 0.0, %v1774
        %1776 = vmatmul.bf16.gmra.mxu0 %v366
        %v1777 = vpop.f32.mrf.mxu0
        %v1778 = vadd.f32 0.0, %v1777
        %v1779 = vpop.f32.mrf.mxu0
        %v1780 = vadd.f32 0.0, %v1779
        %1781 = vmatmul.bf16.gmra.mxu0 %v367
        %v1782 = vpop.f32.mrf.mxu0
        %v1783 = vadd.f32 0.0, %v1782
        %v1784 = vpop.f32.mrf.mxu0
        %v1785 = vadd.f32 0.0, %v1784
        %1786 = vmatmul.bf16.gmra.mxu0 %v368
        %v1787 = vpop.f32.mrf.mxu0
        %v1788 = vadd.f32 0.0, %v1787
        %v1789 = vpop.f32.mrf.mxu0
        %v1790 = vadd.f32 0.0, %v1789
        %1791 = vmatmul.bf16.gmra.mxu0 %v369
        %v1792 = vpop.f32.mrf.mxu0
        %v1793 = vadd.f32 0.0, %v1792
        %v1794 = vpop.f32.mrf.mxu0
        %v1795 = vadd.f32 0.0, %v1794
        %1796 = vmatmul.bf16.gmra.mxu0 %v370
        %v1797 = vpop.f32.mrf.mxu0
        %v1798 = vadd.f32 0.0, %v1797
        %v1799 = vpop.f32.mrf.mxu0
        %1800 = vdwg.mxu0
        %1801 = vmatpush.bf16.msra.mxu0 %v1675
        %1802 = vmatpush.bf16.msra.mxu0 %v1674
        %1803 = vmatpush.bf16.msra.mxu0 %v1673
        %1804 = vmatpush.bf16.msra.mxu0 %v1672
        %1805 = vmatpush.bf16.msra.mxu0 %v1671
        %1806 = vmatpush.bf16.msra.mxu0 %v1670
        %1807 = vmatpush.bf16.msra.mxu0 %v1669
        %1808 = vmatpush.bf16.msra.mxu0 %v1668
        %1809 = vmatmul.bf16.gmra.mxu0 %v356
        %v1810 = vpop.f32.mrf.mxu0
        %v1811 = vadd.f32 %v1718, %v1810
        %v1812 = vpop.f32.mrf.mxu0
        %v1813 = vadd.f32 %v1720, %v1812
        %1814 = vmatmul.bf16.gmra.mxu0 %v357
        %v1815 = vpop.f32.mrf.mxu0
        %v1816 = vadd.f32 %v1723, %v1815
        %v1817 = vpop.f32.mrf.mxu0
        %v1818 = vadd.f32 %v1725, %v1817
        %1819 = vmatmul.bf16.gmra.mxu0 %v358
        %v1820 = vpop.f32.mrf.mxu0
        %v1821 = vadd.f32 %v1728, %v1820
        %v1822 = vpop.f32.mrf.mxu0
        %v1823 = vadd.f32 %v1730, %v1822
        %1824 = vmatmul.bf16.gmra.mxu0 %v359
        %v1825 = vpop.f32.mrf.mxu0
        %v1826 = vadd.f32 %v1733, %v1825
        %v1827 = vpop.f32.mrf.mxu0
        %v1828 = vadd.f32 %v1735, %v1827
        %1829 = vmatmul.bf16.gmra.mxu0 %v360
        %v1830 = vpop.f32.mrf.mxu0
        %v1831 = vadd.f32 %v1738, %v1830
        %v1832 = vpop.f32.mrf.mxu0
        %v1833 = vadd.f32 %v1740, %v1832
        %1834 = vmatmul.bf16.gmra.mxu0 %v361
        %v1835 = vpop.f32.mrf.mxu0
        %v1836 = vadd.f32 %v1743, %v1835
        %v1837 = vpop.f32.mrf.mxu0
        %v1838 = vadd.f32 %v1745, %v1837
        %1839 = vmatmul.bf16.gmra.mxu0 %v362
        %v1840 = vpop.f32.mrf.mxu0
        %v1841 = vadd.f32 %v1748, %v1840
        %v1842 = vpop.f32.mrf.mxu0
        %v1843 = vadd.f32 %v1750, %v1842
        %1844 = vmatmul.bf16.gmra.mxu0 %v363
        %v1845 = vpop.f32.mrf.mxu0
        %v1846 = vadd.f32 %v1753, %v1845
        %v1847 = vpop.f32.mrf.mxu0
        %v1848 = vadd.f32 %v1755, %v1847
        %1849 = vmatmul.bf16.gmra.mxu0 %v364
        %v1850 = vpop.f32.mrf.mxu0
        %v1851 = vadd.f32 %v1758, %v1850
        %v1852 = vpop.f32.mrf.mxu0
        %v1853 = vadd.f32 %v1760, %v1852
        %1854 = vmatmul.bf16.gmra.mxu0 %v365
        %v1855 = vpop.f32.mrf.mxu0
        %v1856 = vadd.f32 %v1763, %v1855
        %v1857 = vpop.f32.mrf.mxu0
        %v1858 = vadd.f32 %v1765, %v1857
        %1859 = vmatmul.bf16.gmra.mxu0 %v366
        %v1860 = vpop.f32.mrf.mxu0
        %v1861 = vadd.f32 %v1768, %v1860
        %v1862 = vpop.f32.mrf.mxu0
        %v1863 = vadd.f32 %v1770, %v1862
        %1864 = vmatmul.bf16.gmra.mxu0 %v367
        %v1865 = vpop.f32.mrf.mxu0
        %v1866 = vadd.f32 %v1773, %v1865
        %v1867 = vpop.f32.mrf.mxu0
        %v1868 = vadd.f32 %v1775, %v1867
        %1869 = vmatmul.bf16.gmra.mxu0 %v368
        %v1870 = vpop.f32.mrf.mxu0
        %v1871 = vadd.f32 %v1778, %v1870
        %v1872 = vpop.f32.mrf.mxu0
        %v1873 = vadd.f32 %v1780, %v1872
        %1874 = vmatmul.bf16.gmra.mxu0 %v369
        %v1875 = vpop.f32.mrf.mxu0
        %v1876 = vadd.f32 %v1783, %v1875
        %v1877 = vpop.f32.mrf.mxu0
        %v1878 = vadd.f32 %v1785, %v1877
        %1879 = vmatmul.bf16.gmra.mxu0 %v370
        %v1880 = vpop.f32.mrf.mxu0
        %v1881 = vadd.f32 %v1788, %v1880
        %v1882 = vpop.f32.mrf.mxu0
        %v1883 = vadd.f32 %v1790, %v1882
        %1884 = vmatmul.bf16.gmra.mxu0 %v396
        %v1885 = vpop.f32.mrf.mxu0
        %v1886 = vadd.f32 %v1793, %v1885
        %v1887 = vpop.f32.mrf.mxu0
        %v1888 = vadd.f32 %v1795, %v1887
        %1889 = vmatmul.bf16.gmra.mxu0 %v397
        %v1890 = vpop.f32.mrf.mxu0
        %v1891 = vadd.f32 %v1798, %v1890
        %v1892 = vpop.f32.mrf.mxu0
        %1893 = vdwg.mxu0
        %1894 = vmatpush.bf16.msra.mxu0 %v1683
        %1895 = vmatpush.bf16.msra.mxu0 %v1682
        %1896 = vmatpush.bf16.msra.mxu0 %v1681
        %1897 = vmatpush.bf16.msra.mxu0 %v1680
        %1898 = vmatpush.bf16.msra.mxu0 %v1679
        %1899 = vmatpush.bf16.msra.mxu0 %v1678
        %1900 = vmatpush.bf16.msra.mxu0 %v1677
        %1901 = vmatpush.bf16.msra.mxu0 %v1676
        %1902 = vmatmul.bf16.gmra.mxu0 %v358
        %v1903 = vpop.f32.mrf.mxu0
        %v1904 = vadd.f32 %v1811, %v1903
        %v1905 = vpop.f32.mrf.mxu0
        %v1906 = vadd.f32 %v1813, %v1905
        %1907 = vmatmul.bf16.gmra.mxu0 %v359
        %v1908 = vpop.f32.mrf.mxu0
        %v1909 = vadd.f32 %v1816, %v1908
        %v1910 = vpop.f32.mrf.mxu0
        %v1911 = vadd.f32 %v1818, %v1910
        %1912 = vmatmul.bf16.gmra.mxu0 %v360
        %v1913 = vpop.f32.mrf.mxu0
        %v1914 = vadd.f32 %v1821, %v1913
        %v1915 = vpop.f32.mrf.mxu0
        %v1916 = vadd.f32 %v1823, %v1915
        %1917 = vmatmul.bf16.gmra.mxu0 %v361
        %v1918 = vpop.f32.mrf.mxu0
        %v1919 = vadd.f32 %v1826, %v1918
        %v1920 = vpop.f32.mrf.mxu0
        %v1921 = vadd.f32 %v1828, %v1920
        %1922 = vmatmul.bf16.gmra.mxu0 %v362
        %v1923 = vpop.f32.mrf.mxu0
        %v1924 = vadd.f32 %v1831, %v1923
        %v1925 = vpop.f32.mrf.mxu0
        %v1926 = vadd.f32 %v1833, %v1925
        %1927 = vmatmul.bf16.gmra.mxu0 %v363
        %v1928 = vpop.f32.mrf.mxu0
        %v1929 = vadd.f32 %v1836, %v1928
        %v1930 = vpop.f32.mrf.mxu0
        %v1931 = vadd.f32 %v1838, %v1930
        %1932 = vmatmul.bf16.gmra.mxu0 %v364
        %v1933 = vpop.f32.mrf.mxu0
        %v1934 = vadd.f32 %v1841, %v1933
        %v1935 = vpop.f32.mrf.mxu0
        %v1936 = vadd.f32 %v1843, %v1935
        %1937 = vmatmul.bf16.gmra.mxu0 %v365
        %v1938 = vpop.f32.mrf.mxu0
        %v1939 = vadd.f32 %v1846, %v1938
        %v1940 = vpop.f32.mrf.mxu0
        %v1941 = vadd.f32 %v1848, %v1940
        %1942 = vmatmul.bf16.gmra.mxu0 %v366
        %v1943 = vpop.f32.mrf.mxu0
        %v1944 = vadd.f32 %v1851, %v1943
        %v1945 = vpop.f32.mrf.mxu0
        %v1946 = vadd.f32 %v1853, %v1945
        %1947 = vmatmul.bf16.gmra.mxu0 %v367
        %v1948 = vpop.f32.mrf.mxu0
        %v1949 = vadd.f32 %v1856, %v1948
        %v1950 = vpop.f32.mrf.mxu0
        %v1951 = vadd.f32 %v1858, %v1950
        %1952 = vmatmul.bf16.gmra.mxu0 %v368
        %v1953 = vpop.f32.mrf.mxu0
        %v1954 = vadd.f32 %v1861, %v1953
        %v1955 = vpop.f32.mrf.mxu0
        %v1956 = vadd.f32 %v1863, %v1955
        %1957 = vmatmul.bf16.gmra.mxu0 %v369
        %v1958 = vpop.f32.mrf.mxu0
        %v1959 = vadd.f32 %v1866, %v1958
        %v1960 = vpop.f32.mrf.mxu0
        %v1961 = vadd.f32 %v1868, %v1960
        %1962 = vmatmul.bf16.gmra.mxu0 %v370
        %v1963 = vpop.f32.mrf.mxu0
        %v1964 = vadd.f32 %v1871, %v1963
        %v1965 = vpop.f32.mrf.mxu0
        %v1966 = vadd.f32 %v1873, %v1965
        %1967 = vmatmul.bf16.gmra.mxu0 %v396
        %v1968 = vpop.f32.mrf.mxu0
        %v1969 = vadd.f32 %v1876, %v1968
        %v1970 = vpop.f32.mrf.mxu0
        %v1971 = vadd.f32 %v1878, %v1970
        %1972 = vmatmul.bf16.gmra.mxu0 %v397
        %v1973 = vpop.f32.mrf.mxu0
        %v1974 = vadd.f32 %v1881, %v1973
        %v1975 = vpop.f32.mrf.mxu0
        %v1976 = vadd.f32 %v1883, %v1975
        %1977 = vmatmul.bf16.gmra.mxu0 %v408
        %v1978 = vpop.f32.mrf.mxu0
        %v1979 = vadd.f32 %v1886, %v1978
        %v1980 = vpop.f32.mrf.mxu0
        %v1981 = vadd.f32 %v1888, %v1980
        %1982 = vmatmul.bf16.gmra.mxu0 %v409
        %v1983 = vpop.f32.mrf.mxu0
        %v1984 = vadd.f32 %v1891, %v1983
        %v1985 = vpop.f32.mrf.mxu0
        %1986 = vdwg.mxu0
        %vm2020 = vcmask 1045504
        %v2021 = vrot.slane %v1904, 2
        %v2022 = vrot.slane %v1906, 2
        %v2023 = vsel %vm2020, %v2021, %v2022
        %v2024 = vrot.slane %v1909, 2
        %v2025 = vsel %vm2020, %v2022, %v2024
        %v2026 = vrot.slane %v1911, 2
        %v2027 = vsel %vm2020, %v2024, %v2026
        %v2028 = vrot.slane %v1914, 2
        %v2029 = vsel %vm2020, %v2026, %v2028
        %v2030 = vrot.slane %v1916, 2
        %v2031 = vsel %vm2020, %v2028, %v2030
        %v2032 = vrot.slane %v1919, 2
        %v2033 = vsel %vm2020, %v2030, %v2032
        %v2034 = vrot.slane %v1921, 2
        %v2035 = vsel %vm2020, %v2032, %v2034
        %v2036 = vrot.slane %v1924, 2
        %v2037 = vsel %vm2020, %v2034, %v2036
        %v2038 = vrot.slane %v1926, 2
        %v2039 = vsel %vm2020, %v2036, %v2038
        %v2040 = vrot.slane %v1929, 2
        %v2041 = vsel %vm2020, %v2038, %v2040
        %v2042 = vrot.slane %v1931, 2
        %v2043 = vsel %vm2020, %v2040, %v2042
        %v2044 = vrot.slane %v1934, 2
        %v2045 = vsel %vm2020, %v2042, %v2044
        %v2046 = vrot.slane %v1936, 2
        %v2047 = vsel %vm2020, %v2044, %v2046
        %v2048 = vrot.slane %v1939, 2
        %v2049 = vsel %vm2020, %v2046, %v2048
        %v2050 = vrot.slane %v1941, 2
        %v2051 = vsel %vm2020, %v2048, %v2050
        %v2052 = vrot.slane %v1944, 2
        %v2053 = vsel %vm2020, %v2050, %v2052
        %v2054 = vrot.slane %v1946, 2
        %v2055 = vsel %vm2020, %v2052, %v2054
        %v2056 = vrot.slane %v1949, 2
        %v2057 = vsel %vm2020, %v2054, %v2056
        %v2058 = vrot.slane %v1951, 2
        %v2059 = vsel %vm2020, %v2056, %v2058
        %v2060 = vrot.slane %v1954, 2
        %v2061 = vsel %vm2020, %v2058, %v2060
        %v2062 = vrot.slane %v1956, 2
        %v2063 = vsel %vm2020, %v2060, %v2062
        %v2064 = vrot.slane %v1959, 2
        %v2065 = vsel %vm2020, %v2062, %v2064
        %v2066 = vrot.slane %v1961, 2
        %v2067 = vsel %vm2020, %v2064, %v2066
        %v2068 = vrot.slane %v1964, 2
        %v2069 = vsel %vm2020, %v2066, %v2068
        %v2070 = vrot.slane %v1966, 2
        %v2071 = vsel %vm2020, %v2068, %v2070
        %v2072 = vrot.slane %v1969, 2
        %v2073 = vsel %vm2020, %v2070, %v2072
        %v2074 = vrot.slane %v1971, 2
        %v2075 = vsel %vm2020, %v2072, %v2074
        %v2076 = vrot.slane %v1974, 2
        %v2077 = vsel %vm2020, %v2074, %v2076
        %v2078 = vrot.slane %v1976, 2
        %v2079 = vsel %vm2020, %v2076, %v2078
        %v2080 = vrot.slane %v1979, 2
        %v2081 = vsel %vm2020, %v2078, %v2080
        %v2082 = vrot.slane %v1981, 2
        %v2083 = vsel %vm2020, %v2080, %v2082
        %v2084 = vrot.slane %v1984, 2
        %v2085 = vsel %vm2020, %v2082, %v2084
        %v2118 = vadd.f32 %v1483, %v2023
        %v2119 = vadd.f32 %v1484, %v2025
        %v2120 = vadd.f32 %v1485, %v2027
        %v2121 = vadd.f32 %v1486, %v2029
        %v2122 = vadd.f32 %v1487, %v2031
        %v2123 = vadd.f32 %v1488, %v2033
        %v2124 = vadd.f32 %v1489, %v2035
        %v2125 = vadd.f32 %v1490, %v2037
        %v2126 = vadd.f32 %v1491, %v2039
        %v2127 = vadd.f32 %v1492, %v2041
        %v2128 = vadd.f32 %v1493, %v2043
        %v2129 = vadd.f32 %v1494, %v2045
        %v2130 = vadd.f32 %v1495, %v2047
        %v2131 = vadd.f32 %v1496, %v2049
        %v2132 = vadd.f32 %v1497, %v2051
        %v2133 = vadd.f32 %v1498, %v2053
        %v2134 = vadd.f32 %v1499, %v2055
        %v2135 = vadd.f32 %v1500, %v2057
        %v2136 = vadd.f32 %v1501, %v2059
        %v2137 = vadd.f32 %v1502, %v2061
        %v2138 = vadd.f32 %v1503, %v2063
        %v2139 = vadd.f32 %v1504, %v2065
        %v2140 = vadd.f32 %v1505, %v2067
        %v2141 = vadd.f32 %v1506, %v2069
        %v2142 = vadd.f32 %v1507, %v2071
        %v2143 = vadd.f32 %v1508, %v2073
        %v2144 = vadd.f32 %v1509, %v2075
        %v2145 = vadd.f32 %v1510, %v2077
        %v2146 = vadd.f32 %v1511, %v2079
        %v2147 = vadd.f32 %v1512, %v2081
        %v2148 = vadd.f32 %v1513, %v2083
        %v2149 = vadd.f32 %v1514, %v2085
        %v2150 = vld [vmem:[%s242] sm:$0x1]
        %v2152 = vperm.slane %v2150, 0
        %v2154 = vadd.f32 %v2118, %v2152
        %v2155 = vadd.f32 %v2119, %v2152
        %v2156 = vadd.f32 %v2120, %v2152
        %v2157 = vadd.f32 %v2121, %v2152
        %v2158 = vadd.f32 %v2122, %v2152
        %v2159 = vadd.f32 %v2123, %v2152
        %v2160 = vadd.f32 %v2124, %v2152
        %v2161 = vadd.f32 %v2125, %v2152
        %v2162 = vadd.f32 %v2126, %v2152
        %v2163 = vadd.f32 %v2127, %v2152
        %v2164 = vadd.f32 %v2128, %v2152
        %v2165 = vadd.f32 %v2129, %v2152
        %v2166 = vadd.f32 %v2130, %v2152
        %v2167 = vadd.f32 %v2131, %v2152
        %v2168 = vadd.f32 %v2132, %v2152
        %v2169 = vadd.f32 %v2133, %v2152
        %v2170 = vadd.f32 %v2134, %v2152
        %v2171 = vadd.f32 %v2135, %v2152
        %v2172 = vadd.f32 %v2136, %v2152
        %v2173 = vadd.f32 %v2137, %v2152
        %v2174 = vadd.f32 %v2138, %v2152
        %v2175 = vadd.f32 %v2139, %v2152
        %v2176 = vadd.f32 %v2140, %v2152
        %v2177 = vadd.f32 %v2141, %v2152
        %v2178 = vadd.f32 %v2142, %v2152
        %v2179 = vadd.f32 %v2143, %v2152
        %v2180 = vadd.f32 %v2144, %v2152
        %v2181 = vadd.f32 %v2145, %v2152
        %v2182 = vadd.f32 %v2146, %v2152
        %v2183 = vadd.f32 %v2147, %v2152
        %v2184 = vadd.f32 %v2148, %v2152
        %v2185 = vadd.f32 %v2149, %v2152
        %v2186 = vxor.u32 %v2154, 2147483648
        %v2187 = vxor.u32 %v2155, 2147483648
        %v2188 = vxor.u32 %v2156, 2147483648
        %v2189 = vxor.u32 %v2157, 2147483648
        %v2190 = vxor.u32 %v2158, 2147483648
        %v2191 = vxor.u32 %v2159, 2147483648
        %v2192 = vxor.u32 %v2160, 2147483648
        %v2193 = vxor.u32 %v2161, 2147483648
        %v2194 = vxor.u32 %v2162, 2147483648
        %v2195 = vxor.u32 %v2163, 2147483648
        %v2196 = vxor.u32 %v2164, 2147483648
        %v2197 = vxor.u32 %v2165, 2147483648
        %v2198 = vxor.u32 %v2166, 2147483648
        %v2199 = vxor.u32 %v2167, 2147483648
        %v2200 = vxor.u32 %v2168, 2147483648
        %v2201 = vxor.u32 %v2169, 2147483648
        %v2202 = vxor.u32 %v2170, 2147483648
        %v2203 = vxor.u32 %v2171, 2147483648
        %v2204 = vxor.u32 %v2172, 2147483648
        %v2205 = vxor.u32 %v2173, 2147483648
        %v2206 = vxor.u32 %v2174, 2147483648
        %v2207 = vxor.u32 %v2175, 2147483648
        %v2208 = vxor.u32 %v2176, 2147483648
        %v2209 = vxor.u32 %v2177, 2147483648
        %v2210 = vxor.u32 %v2178, 2147483648
        %v2211 = vxor.u32 %v2179, 2147483648
        %v2212 = vxor.u32 %v2180, 2147483648
        %v2213 = vxor.u32 %v2181, 2147483648
        %v2214 = vxor.u32 %v2182, 2147483648
        %v2215 = vxor.u32 %v2183, 2147483648
        %v2216 = vxor.u32 %v2184, 2147483648
        %v2217 = vxor.u32 %v2185, 2147483648
        %v2218 = vmul.f32 %v2186, 1.442695
        %v2219 = vpow.pop %v2218
        %v2220 = vmul.f32 %v2187, 1.442695
        %v2221 = vpow.pop %v2220
        %v2222 = vmul.f32 %v2188, 1.442695
        %v2223 = vpow.pop %v2222
        %v2224 = vmul.f32 %v2189, 1.442695
        %v2225 = vpow.pop %v2224
        %v2226 = vmul.f32 %v2190, 1.442695
        %v2227 = vpow.pop %v2226
        %v2228 = vmul.f32 %v2191, 1.442695
        %v2229 = vpow.pop %v2228
        %v2230 = vmul.f32 %v2192, 1.442695
        %v2231 = vpow.pop %v2230
        %v2232 = vmul.f32 %v2193, 1.442695
        %v2233 = vpow.pop %v2232
        %v2234 = vmul.f32 %v2194, 1.442695
        %v2235 = vpow.pop %v2234
        %v2236 = vmul.f32 %v2195, 1.442695
        %v2237 = vpow.pop %v2236
        %v2238 = vmul.f32 %v2196, 1.442695
        %v2239 = vpow.pop %v2238
        %v2240 = vmul.f32 %v2197, 1.442695
        %v2241 = vpow.pop %v2240
        %v2242 = vmul.f32 %v2198, 1.442695
        %v2243 = vpow.pop %v2242
        %v2244 = vmul.f32 %v2199, 1.442695
        %v2245 = vpow.pop %v2244
        %v2246 = vmul.f32 %v2200, 1.442695
        %v2247 = vpow.pop %v2246
        %v2248 = vmul.f32 %v2201, 1.442695
        %v2249 = vpow.pop %v2248
        %v2250 = vmul.f32 %v2202, 1.442695
        %v2251 = vpow.pop %v2250
        %v2252 = vmul.f32 %v2203, 1.442695
        %v2253 = vpow.pop %v2252
        %v2254 = vmul.f32 %v2204, 1.442695
        %v2255 = vpow.pop %v2254
        %v2256 = vmul.f32 %v2205, 1.442695
        %v2257 = vpow.pop %v2256
        %v2258 = vmul.f32 %v2206, 1.442695
        %v2259 = vpow.pop %v2258
        %v2260 = vmul.f32 %v2207, 1.442695
        %v2261 = vpow.pop %v2260
        %v2262 = vmul.f32 %v2208, 1.442695
        %v2263 = vpow.pop %v2262
        %v2264 = vmul.f32 %v2209, 1.442695
        %v2265 = vpow.pop %v2264
        %v2266 = vmul.f32 %v2210, 1.442695
        %v2267 = vpow.pop %v2266
        %v2268 = vmul.f32 %v2211, 1.442695
        %v2269 = vpow.pop %v2268
        %v2270 = vmul.f32 %v2212, 1.442695
        %v2271 = vpow.pop %v2270
        %v2272 = vmul.f32 %v2213, 1.442695
        %v2273 = vpow.pop %v2272
        %v2274 = vmul.f32 %v2214, 1.442695
        %v2275 = vpow.pop %v2274
        %v2276 = vmul.f32 %v2215, 1.442695
        %v2277 = vpow.pop %v2276
        %v2278 = vmul.f32 %v2216, 1.442695
        %v2279 = vpow.pop %v2278
        %v2280 = vmul.f32 %v2217, 1.442695
        %v2281 = vpow.pop %v2280
        %v2282 = vadd.f32 %v2219, 1.0
        %v2283 = vadd.f32 %v2221, 1.0
        %v2284 = vadd.f32 %v2223, 1.0
        %v2285 = vadd.f32 %v2225, 1.0
        %v2286 = vadd.f32 %v2227, 1.0
        %v2287 = vadd.f32 %v2229, 1.0
        %v2288 = vadd.f32 %v2231, 1.0
        %v2289 = vadd.f32 %v2233, 1.0
        %v2290 = vadd.f32 %v2235, 1.0
        %v2291 = vadd.f32 %v2237, 1.0
        %v2292 = vadd.f32 %v2239, 1.0
        %v2293 = vadd.f32 %v2241, 1.0
        %v2294 = vadd.f32 %v2243, 1.0
        %v2295 = vadd.f32 %v2245, 1.0
        %v2296 = vadd.f32 %v2247, 1.0
        %v2297 = vadd.f32 %v2249, 1.0
        %v2298 = vadd.f32 %v2251, 1.0
        %v2299 = vadd.f32 %v2253, 1.0
        %v2300 = vadd.f32 %v2255, 1.0
        %v2301 = vadd.f32 %v2257, 1.0
        %v2302 = vadd.f32 %v2259, 1.0
        %v2303 = vadd.f32 %v2261, 1.0
        %v2304 = vadd.f32 %v2263, 1.0
        %v2305 = vadd.f32 %v2265, 1.0
        %v2306 = vadd.f32 %v2267, 1.0
        %v2307 = vadd.f32 %v2269, 1.0
        %v2308 = vadd.f32 %v2271, 1.0
        %v2309 = vadd.f32 %v2273, 1.0
        %v2310 = vadd.f32 %v2275, 1.0
        %v2311 = vadd.f32 %v2277, 1.0
        %v2312 = vadd.f32 %v2279, 1.0
        %v2313 = vadd.f32 %v2281, 1.0
        %v2314 = vrcp.pop %v2282
        %v2315 = vmul.f32 %v2282, %v2314
        %v2316 = vsub.f32 1.0, %v2315
        %v2317 = vmul.f32 %v2314, %v2316
        %v2318 = vadd.f32 %v2314, %v2317
        %vm2319 = vweird.f32 %v2282
        %vm2320 = vweird.f32 %v2314
        %vm2321 = vmor %vm2319, %vm2320
        %v2322 = vsel %vm2321, %v2314, %v2318
        %v2323 = vand.u32 2147483647, %v2282
        %vm2324 = vcmp.eq.f32.partialorder %v2323, 8.507059e+37
        %v2325 = vand.u32 %v2282, 2147483648
        %v2326 = vor.u32 1.1754944e-38, %v2325
        %v2327 = vsel %vm2324, %v2326, %v2322
        %v2328 = vmul.f32 1.0, %v2327
        %v2329 = vrcp.pop %v2283
        %v2330 = vmul.f32 %v2283, %v2329
        %v2331 = vsub.f32 1.0, %v2330
        %v2332 = vmul.f32 %v2329, %v2331
        %v2333 = vadd.f32 %v2329, %v2332
        %vm2334 = vweird.f32 %v2283
        %vm2335 = vweird.f32 %v2329
        %vm2336 = vmor %vm2334, %vm2335
        %v2337 = vsel %vm2336, %v2329, %v2333
        %v2338 = vand.u32 2147483647, %v2283
        %vm2339 = vcmp.eq.f32.partialorder %v2338, 8.507059e+37
        %v2340 = vand.u32 %v2283, 2147483648
        %v2341 = vor.u32 1.1754944e-38, %v2340
        %v2342 = vsel %vm2339, %v2341, %v2337
        %v2343 = vmul.f32 1.0, %v2342
        %v2344 = vrcp.pop %v2284
        %v2345 = vmul.f32 %v2284, %v2344
        %v2346 = vsub.f32 1.0, %v2345
        %v2347 = vmul.f32 %v2344, %v2346
        %v2348 = vadd.f32 %v2344, %v2347
        %vm2349 = vweird.f32 %v2284
        %vm2350 = vweird.f32 %v2344
        %vm2351 = vmor %vm2349, %vm2350
        %v2352 = vsel %vm2351, %v2344, %v2348
        %v2353 = vand.u32 2147483647, %v2284
        %vm2354 = vcmp.eq.f32.partialorder %v2353, 8.507059e+37
        %v2355 = vand.u32 %v2284, 2147483648
        %v2356 = vor.u32 1.1754944e-38, %v2355
        %v2357 = vsel %vm2354, %v2356, %v2352
        %v2358 = vmul.f32 1.0, %v2357
        %v2359 = vrcp.pop %v2285
        %v2360 = vmul.f32 %v2285, %v2359
        %v2361 = vsub.f32 1.0, %v2360
        %v2362 = vmul.f32 %v2359, %v2361
        %v2363 = vadd.f32 %v2359, %v2362
        %vm2364 = vweird.f32 %v2285
        %vm2365 = vweird.f32 %v2359
        %vm2366 = vmor %vm2364, %vm2365
        %v2367 = vsel %vm2366, %v2359, %v2363
        %v2368 = vand.u32 2147483647, %v2285
        %vm2369 = vcmp.eq.f32.partialorder %v2368, 8.507059e+37
        %v2370 = vand.u32 %v2285, 2147483648
        %v2371 = vor.u32 1.1754944e-38, %v2370
        %v2372 = vsel %vm2369, %v2371, %v2367
        %v2373 = vmul.f32 1.0, %v2372
        %v2374 = vrcp.pop %v2286
        %v2375 = vmul.f32 %v2286, %v2374
        %v2376 = vsub.f32 1.0, %v2375
        %v2377 = vmul.f32 %v2374, %v2376
        %v2378 = vadd.f32 %v2374, %v2377
        %vm2379 = vweird.f32 %v2286
        %vm2380 = vweird.f32 %v2374
        %vm2381 = vmor %vm2379, %vm2380
        %v2382 = vsel %vm2381, %v2374, %v2378
        %v2383 = vand.u32 2147483647, %v2286
        %vm2384 = vcmp.eq.f32.partialorder %v2383, 8.507059e+37
        %v2385 = vand.u32 %v2286, 2147483648
        %v2386 = vor.u32 1.1754944e-38, %v2385
        %v2387 = vsel %vm2384, %v2386, %v2382
        %v2388 = vmul.f32 1.0, %v2387
        %v2389 = vrcp.pop %v2287
        %v2390 = vmul.f32 %v2287, %v2389
        %v2391 = vsub.f32 1.0, %v2390
        %v2392 = vmul.f32 %v2389, %v2391
        %v2393 = vadd.f32 %v2389, %v2392
        %vm2394 = vweird.f32 %v2287
        %vm2395 = vweird.f32 %v2389
        %vm2396 = vmor %vm2394, %vm2395
        %v2397 = vsel %vm2396, %v2389, %v2393
        %v2398 = vand.u32 2147483647, %v2287
        %vm2399 = vcmp.eq.f32.partialorder %v2398, 8.507059e+37
        %v2400 = vand.u32 %v2287, 2147483648
        %v2401 = vor.u32 1.1754944e-38, %v2400
        %v2402 = vsel %vm2399, %v2401, %v2397
        %v2403 = vmul.f32 1.0, %v2402
        %v2404 = vrcp.pop %v2288
        %v2405 = vmul.f32 %v2288, %v2404
        %v2406 = vsub.f32 1.0, %v2405
        %v2407 = vmul.f32 %v2404, %v2406
        %v2408 = vadd.f32 %v2404, %v2407
        %vm2409 = vweird.f32 %v2288
        %vm2410 = vweird.f32 %v2404
        %vm2411 = vmor %vm2409, %vm2410
        %v2412 = vsel %vm2411, %v2404, %v2408
        %v2413 = vand.u32 2147483647, %v2288
        %vm2414 = vcmp.eq.f32.partialorder %v2413, 8.507059e+37
        %v2415 = vand.u32 %v2288, 2147483648
        %v2416 = vor.u32 1.1754944e-38, %v2415
        %v2417 = vsel %vm2414, %v2416, %v2412
        %v2418 = vmul.f32 1.0, %v2417
        %v2419 = vrcp.pop %v2289
        %v2420 = vmul.f32 %v2289, %v2419
        %v2421 = vsub.f32 1.0, %v2420
        %v2422 = vmul.f32 %v2419, %v2421
        %v2423 = vadd.f32 %v2419, %v2422
        %vm2424 = vweird.f32 %v2289
        %vm2425 = vweird.f32 %v2419
        %vm2426 = vmor %vm2424, %vm2425
        %v2427 = vsel %vm2426, %v2419, %v2423
        %v2428 = vand.u32 2147483647, %v2289
        %vm2429 = vcmp.eq.f32.partialorder %v2428, 8.507059e+37
        %v2430 = vand.u32 %v2289, 2147483648
        %v2431 = vor.u32 1.1754944e-38, %v2430
        %v2432 = vsel %vm2429, %v2431, %v2427
        %v2433 = vmul.f32 1.0, %v2432
        %v2434 = vrcp.pop %v2290
        %v2435 = vmul.f32 %v2290, %v2434
        %v2436 = vsub.f32 1.0, %v2435
        %v2437 = vmul.f32 %v2434, %v2436
        %v2438 = vadd.f32 %v2434, %v2437
        %vm2439 = vweird.f32 %v2290
        %vm2440 = vweird.f32 %v2434
        %vm2441 = vmor %vm2439, %vm2440
        %v2442 = vsel %vm2441, %v2434, %v2438
        %v2443 = vand.u32 2147483647, %v2290
        %vm2444 = vcmp.eq.f32.partialorder %v2443, 8.507059e+37
        %v2445 = vand.u32 %v2290, 2147483648
        %v2446 = vor.u32 1.1754944e-38, %v2445
        %v2447 = vsel %vm2444, %v2446, %v2442
        %v2448 = vmul.f32 1.0, %v2447
        %v2449 = vrcp.pop %v2291
        %v2450 = vmul.f32 %v2291, %v2449
        %v2451 = vsub.f32 1.0, %v2450
        %v2452 = vmul.f32 %v2449, %v2451
        %v2453 = vadd.f32 %v2449, %v2452
        %vm2454 = vweird.f32 %v2291
        %vm2455 = vweird.f32 %v2449
        %vm2456 = vmor %vm2454, %vm2455
        %v2457 = vsel %vm2456, %v2449, %v2453
        %v2458 = vand.u32 2147483647, %v2291
        %vm2459 = vcmp.eq.f32.partialorder %v2458, 8.507059e+37
        %v2460 = vand.u32 %v2291, 2147483648
        %v2461 = vor.u32 1.1754944e-38, %v2460
        %v2462 = vsel %vm2459, %v2461, %v2457
        %v2463 = vmul.f32 1.0, %v2462
        %v2464 = vrcp.pop %v2292
        %v2465 = vmul.f32 %v2292, %v2464
        %v2466 = vsub.f32 1.0, %v2465
        %v2467 = vmul.f32 %v2464, %v2466
        %v2468 = vadd.f32 %v2464, %v2467
        %vm2469 = vweird.f32 %v2292
        %vm2470 = vweird.f32 %v2464
        %vm2471 = vmor %vm2469, %vm2470
        %v2472 = vsel %vm2471, %v2464, %v2468
        %v2473 = vand.u32 2147483647, %v2292
        %vm2474 = vcmp.eq.f32.partialorder %v2473, 8.507059e+37
        %v2475 = vand.u32 %v2292, 2147483648
        %v2476 = vor.u32 1.1754944e-38, %v2475
        %v2477 = vsel %vm2474, %v2476, %v2472
        %v2478 = vmul.f32 1.0, %v2477
        %v2479 = vrcp.pop %v2293
        %v2480 = vmul.f32 %v2293, %v2479
        %v2481 = vsub.f32 1.0, %v2480
        %v2482 = vmul.f32 %v2479, %v2481
        %v2483 = vadd.f32 %v2479, %v2482
        %vm2484 = vweird.f32 %v2293
        %vm2485 = vweird.f32 %v2479
        %vm2486 = vmor %vm2484, %vm2485
        %v2487 = vsel %vm2486, %v2479, %v2483
        %v2488 = vand.u32 2147483647, %v2293
        %vm2489 = vcmp.eq.f32.partialorder %v2488, 8.507059e+37
        %v2490 = vand.u32 %v2293, 2147483648
        %v2491 = vor.u32 1.1754944e-38, %v2490
        %v2492 = vsel %vm2489, %v2491, %v2487
        %v2493 = vmul.f32 1.0, %v2492
        %v2494 = vrcp.pop %v2294
        %v2495 = vmul.f32 %v2294, %v2494
        %v2496 = vsub.f32 1.0, %v2495
        %v2497 = vmul.f32 %v2494, %v2496
        %v2498 = vadd.f32 %v2494, %v2497
        %vm2499 = vweird.f32 %v2294
        %vm2500 = vweird.f32 %v2494
        %vm2501 = vmor %vm2499, %vm2500
        %v2502 = vsel %vm2501, %v2494, %v2498
        %v2503 = vand.u32 2147483647, %v2294
        %vm2504 = vcmp.eq.f32.partialorder %v2503, 8.507059e+37
        %v2505 = vand.u32 %v2294, 2147483648
        %v2506 = vor.u32 1.1754944e-38, %v2505
        %v2507 = vsel %vm2504, %v2506, %v2502
        %v2508 = vmul.f32 1.0, %v2507
        %v2509 = vrcp.pop %v2295
        %v2510 = vmul.f32 %v2295, %v2509
        %v2511 = vsub.f32 1.0, %v2510
        %v2512 = vmul.f32 %v2509, %v2511
        %v2513 = vadd.f32 %v2509, %v2512
        %vm2514 = vweird.f32 %v2295
        %vm2515 = vweird.f32 %v2509
        %vm2516 = vmor %vm2514, %vm2515
        %v2517 = vsel %vm2516, %v2509, %v2513
        %v2518 = vand.u32 2147483647, %v2295
        %vm2519 = vcmp.eq.f32.partialorder %v2518, 8.507059e+37
        %v2520 = vand.u32 %v2295, 2147483648
        %v2521 = vor.u32 1.1754944e-38, %v2520
        %v2522 = vsel %vm2519, %v2521, %v2517
        %v2523 = vmul.f32 1.0, %v2522
        %v2524 = vrcp.pop %v2296
        %v2525 = vmul.f32 %v2296, %v2524
        %v2526 = vsub.f32 1.0, %v2525
        %v2527 = vmul.f32 %v2524, %v2526
        %v2528 = vadd.f32 %v2524, %v2527
        %vm2529 = vweird.f32 %v2296
        %vm2530 = vweird.f32 %v2524
        %vm2531 = vmor %vm2529, %vm2530
        %v2532 = vsel %vm2531, %v2524, %v2528
        %v2533 = vand.u32 2147483647, %v2296
        %vm2534 = vcmp.eq.f32.partialorder %v2533, 8.507059e+37
        %v2535 = vand.u32 %v2296, 2147483648
        %v2536 = vor.u32 1.1754944e-38, %v2535
        %v2537 = vsel %vm2534, %v2536, %v2532
        %v2538 = vmul.f32 1.0, %v2537
        %v2539 = vrcp.pop %v2297
        %v2540 = vmul.f32 %v2297, %v2539
        %v2541 = vsub.f32 1.0, %v2540
        %v2542 = vmul.f32 %v2539, %v2541
        %v2543 = vadd.f32 %v2539, %v2542
        %vm2544 = vweird.f32 %v2297
        %vm2545 = vweird.f32 %v2539
        %vm2546 = vmor %vm2544, %vm2545
        %v2547 = vsel %vm2546, %v2539, %v2543
        %v2548 = vand.u32 2147483647, %v2297
        %vm2549 = vcmp.eq.f32.partialorder %v2548, 8.507059e+37
        %v2550 = vand.u32 %v2297, 2147483648
        %v2551 = vor.u32 1.1754944e-38, %v2550
        %v2552 = vsel %vm2549, %v2551, %v2547
        %v2553 = vmul.f32 1.0, %v2552
        %v2554 = vrcp.pop %v2298
        %v2555 = vmul.f32 %v2298, %v2554
        %v2556 = vsub.f32 1.0, %v2555
        %v2557 = vmul.f32 %v2554, %v2556
        %v2558 = vadd.f32 %v2554, %v2557
        %vm2559 = vweird.f32 %v2298
        %vm2560 = vweird.f32 %v2554
        %vm2561 = vmor %vm2559, %vm2560
        %v2562 = vsel %vm2561, %v2554, %v2558
        %v2563 = vand.u32 2147483647, %v2298
        %vm2564 = vcmp.eq.f32.partialorder %v2563, 8.507059e+37
        %v2565 = vand.u32 %v2298, 2147483648
        %v2566 = vor.u32 1.1754944e-38, %v2565
        %v2567 = vsel %vm2564, %v2566, %v2562
        %v2568 = vmul.f32 1.0, %v2567
        %v2569 = vrcp.pop %v2299
        %v2570 = vmul.f32 %v2299, %v2569
        %v2571 = vsub.f32 1.0, %v2570
        %v2572 = vmul.f32 %v2569, %v2571
        %v2573 = vadd.f32 %v2569, %v2572
        %vm2574 = vweird.f32 %v2299
        %vm2575 = vweird.f32 %v2569
        %vm2576 = vmor %vm2574, %vm2575
        %v2577 = vsel %vm2576, %v2569, %v2573
        %v2578 = vand.u32 2147483647, %v2299
        %vm2579 = vcmp.eq.f32.partialorder %v2578, 8.507059e+37
        %v2580 = vand.u32 %v2299, 2147483648
        %v2581 = vor.u32 1.1754944e-38, %v2580
        %v2582 = vsel %vm2579, %v2581, %v2577
        %v2583 = vmul.f32 1.0, %v2582
        %v2584 = vrcp.pop %v2300
        %v2585 = vmul.f32 %v2300, %v2584
        %v2586 = vsub.f32 1.0, %v2585
        %v2587 = vmul.f32 %v2584, %v2586
        %v2588 = vadd.f32 %v2584, %v2587
        %vm2589 = vweird.f32 %v2300
        %vm2590 = vweird.f32 %v2584
        %vm2591 = vmor %vm2589, %vm2590
        %v2592 = vsel %vm2591, %v2584, %v2588
        %v2593 = vand.u32 2147483647, %v2300
        %vm2594 = vcmp.eq.f32.partialorder %v2593, 8.507059e+37
        %v2595 = vand.u32 %v2300, 2147483648
        %v2596 = vor.u32 1.1754944e-38, %v2595
        %v2597 = vsel %vm2594, %v2596, %v2592
        %v2598 = vmul.f32 1.0, %v2597
        %v2599 = vrcp.pop %v2301
        %v2600 = vmul.f32 %v2301, %v2599
        %v2601 = vsub.f32 1.0, %v2600
        %v2602 = vmul.f32 %v2599, %v2601
        %v2603 = vadd.f32 %v2599, %v2602
        %vm2604 = vweird.f32 %v2301
        %vm2605 = vweird.f32 %v2599
        %vm2606 = vmor %vm2604, %vm2605
        %v2607 = vsel %vm2606, %v2599, %v2603
        %v2608 = vand.u32 2147483647, %v2301
        %vm2609 = vcmp.eq.f32.partialorder %v2608, 8.507059e+37
        %v2610 = vand.u32 %v2301, 2147483648
        %v2611 = vor.u32 1.1754944e-38, %v2610
        %v2612 = vsel %vm2609, %v2611, %v2607
        %v2613 = vmul.f32 1.0, %v2612
        %v2614 = vrcp.pop %v2302
        %v2615 = vmul.f32 %v2302, %v2614
        %v2616 = vsub.f32 1.0, %v2615
        %v2617 = vmul.f32 %v2614, %v2616
        %v2618 = vadd.f32 %v2614, %v2617
        %vm2619 = vweird.f32 %v2302
        %vm2620 = vweird.f32 %v2614
        %vm2621 = vmor %vm2619, %vm2620
        %v2622 = vsel %vm2621, %v2614, %v2618
        %v2623 = vand.u32 2147483647, %v2302
        %vm2624 = vcmp.eq.f32.partialorder %v2623, 8.507059e+37
        %v2625 = vand.u32 %v2302, 2147483648
        %v2626 = vor.u32 1.1754944e-38, %v2625
        %v2627 = vsel %vm2624, %v2626, %v2622
        %v2628 = vmul.f32 1.0, %v2627
        %v2629 = vrcp.pop %v2303
        %v2630 = vmul.f32 %v2303, %v2629
        %v2631 = vsub.f32 1.0, %v2630
        %v2632 = vmul.f32 %v2629, %v2631
        %v2633 = vadd.f32 %v2629, %v2632
        %vm2634 = vweird.f32 %v2303
        %vm2635 = vweird.f32 %v2629
        %vm2636 = vmor %vm2634, %vm2635
        %v2637 = vsel %vm2636, %v2629, %v2633
        %v2638 = vand.u32 2147483647, %v2303
        %vm2639 = vcmp.eq.f32.partialorder %v2638, 8.507059e+37
        %v2640 = vand.u32 %v2303, 2147483648
        %v2641 = vor.u32 1.1754944e-38, %v2640
        %v2642 = vsel %vm2639, %v2641, %v2637
        %v2643 = vmul.f32 1.0, %v2642
        %v2644 = vrcp.pop %v2304
        %v2645 = vmul.f32 %v2304, %v2644
        %v2646 = vsub.f32 1.0, %v2645
        %v2647 = vmul.f32 %v2644, %v2646
        %v2648 = vadd.f32 %v2644, %v2647
        %vm2649 = vweird.f32 %v2304
        %vm2650 = vweird.f32 %v2644
        %vm2651 = vmor %vm2649, %vm2650
        %v2652 = vsel %vm2651, %v2644, %v2648
        %v2653 = vand.u32 2147483647, %v2304
        %vm2654 = vcmp.eq.f32.partialorder %v2653, 8.507059e+37
        %v2655 = vand.u32 %v2304, 2147483648
        %v2656 = vor.u32 1.1754944e-38, %v2655
        %v2657 = vsel %vm2654, %v2656, %v2652
        %v2658 = vmul.f32 1.0, %v2657
        %v2659 = vrcp.pop %v2305
        %v2660 = vmul.f32 %v2305, %v2659
        %v2661 = vsub.f32 1.0, %v2660
        %v2662 = vmul.f32 %v2659, %v2661
        %v2663 = vadd.f32 %v2659, %v2662
        %vm2664 = vweird.f32 %v2305
        %vm2665 = vweird.f32 %v2659
        %vm2666 = vmor %vm2664, %vm2665
        %v2667 = vsel %vm2666, %v2659, %v2663
        %v2668 = vand.u32 2147483647, %v2305
        %vm2669 = vcmp.eq.f32.partialorder %v2668, 8.507059e+37
        %v2670 = vand.u32 %v2305, 2147483648
        %v2671 = vor.u32 1.1754944e-38, %v2670
        %v2672 = vsel %vm2669, %v2671, %v2667
        %v2673 = vmul.f32 1.0, %v2672
        %v2674 = vrcp.pop %v2306
        %v2675 = vmul.f32 %v2306, %v2674
        %v2676 = vsub.f32 1.0, %v2675
        %v2677 = vmul.f32 %v2674, %v2676
        %v2678 = vadd.f32 %v2674, %v2677
        %vm2679 = vweird.f32 %v2306
        %vm2680 = vweird.f32 %v2674
        %vm2681 = vmor %vm2679, %vm2680
        %v2682 = vsel %vm2681, %v2674, %v2678
        %v2683 = vand.u32 2147483647, %v2306
        %vm2684 = vcmp.eq.f32.partialorder %v2683, 8.507059e+37
        %v2685 = vand.u32 %v2306, 2147483648
        %v2686 = vor.u32 1.1754944e-38, %v2685
        %v2687 = vsel %vm2684, %v2686, %v2682
        %v2688 = vmul.f32 1.0, %v2687
        %v2689 = vrcp.pop %v2307
        %v2690 = vmul.f32 %v2307, %v2689
        %v2691 = vsub.f32 1.0, %v2690
        %v2692 = vmul.f32 %v2689, %v2691
        %v2693 = vadd.f32 %v2689, %v2692
        %vm2694 = vweird.f32 %v2307
        %vm2695 = vweird.f32 %v2689
        %vm2696 = vmor %vm2694, %vm2695
        %v2697 = vsel %vm2696, %v2689, %v2693
        %v2698 = vand.u32 2147483647, %v2307
        %vm2699 = vcmp.eq.f32.partialorder %v2698, 8.507059e+37
        %v2700 = vand.u32 %v2307, 2147483648
        %v2701 = vor.u32 1.1754944e-38, %v2700
        %v2702 = vsel %vm2699, %v2701, %v2697
        %v2703 = vmul.f32 1.0, %v2702
        %v2704 = vrcp.pop %v2308
        %v2705 = vmul.f32 %v2308, %v2704
        %v2706 = vsub.f32 1.0, %v2705
        %v2707 = vmul.f32 %v2704, %v2706
        %v2708 = vadd.f32 %v2704, %v2707
        %vm2709 = vweird.f32 %v2308
        %vm2710 = vweird.f32 %v2704
        %vm2711 = vmor %vm2709, %vm2710
        %v2712 = vsel %vm2711, %v2704, %v2708
        %v2713 = vand.u32 2147483647, %v2308
        %vm2714 = vcmp.eq.f32.partialorder %v2713, 8.507059e+37
        %v2715 = vand.u32 %v2308, 2147483648
        %v2716 = vor.u32 1.1754944e-38, %v2715
        %v2717 = vsel %vm2714, %v2716, %v2712
        %v2718 = vmul.f32 1.0, %v2717
        %v2719 = vrcp.pop %v2309
        %v2720 = vmul.f32 %v2309, %v2719
        %v2721 = vsub.f32 1.0, %v2720
        %v2722 = vmul.f32 %v2719, %v2721
        %v2723 = vadd.f32 %v2719, %v2722
        %vm2724 = vweird.f32 %v2309
        %vm2725 = vweird.f32 %v2719
        %vm2726 = vmor %vm2724, %vm2725
        %v2727 = vsel %vm2726, %v2719, %v2723
        %v2728 = vand.u32 2147483647, %v2309
        %vm2729 = vcmp.eq.f32.partialorder %v2728, 8.507059e+37
        %v2730 = vand.u32 %v2309, 2147483648
        %v2731 = vor.u32 1.1754944e-38, %v2730
        %v2732 = vsel %vm2729, %v2731, %v2727
        %v2733 = vmul.f32 1.0, %v2732
        %v2734 = vrcp.pop %v2310
        %v2735 = vmul.f32 %v2310, %v2734
        %v2736 = vsub.f32 1.0, %v2735
        %v2737 = vmul.f32 %v2734, %v2736
        %v2738 = vadd.f32 %v2734, %v2737
        %vm2739 = vweird.f32 %v2310
        %vm2740 = vweird.f32 %v2734
        %vm2741 = vmor %vm2739, %vm2740
        %v2742 = vsel %vm2741, %v2734, %v2738
        %v2743 = vand.u32 2147483647, %v2310
        %vm2744 = vcmp.eq.f32.partialorder %v2743, 8.507059e+37
        %v2745 = vand.u32 %v2310, 2147483648
        %v2746 = vor.u32 1.1754944e-38, %v2745
        %v2747 = vsel %vm2744, %v2746, %v2742
        %v2748 = vmul.f32 1.0, %v2747
        %v2749 = vrcp.pop %v2311
        %v2750 = vmul.f32 %v2311, %v2749
        %v2751 = vsub.f32 1.0, %v2750
        %v2752 = vmul.f32 %v2749, %v2751
        %v2753 = vadd.f32 %v2749, %v2752
        %vm2754 = vweird.f32 %v2311
        %vm2755 = vweird.f32 %v2749
        %vm2756 = vmor %vm2754, %vm2755
        %v2757 = vsel %vm2756, %v2749, %v2753
        %v2758 = vand.u32 2147483647, %v2311
        %vm2759 = vcmp.eq.f32.partialorder %v2758, 8.507059e+37
        %v2760 = vand.u32 %v2311, 2147483648
        %v2761 = vor.u32 1.1754944e-38, %v2760
        %v2762 = vsel %vm2759, %v2761, %v2757
        %v2763 = vmul.f32 1.0, %v2762
        %v2764 = vrcp.pop %v2312
        %v2765 = vmul.f32 %v2312, %v2764
        %v2766 = vsub.f32 1.0, %v2765
        %v2767 = vmul.f32 %v2764, %v2766
        %v2768 = vadd.f32 %v2764, %v2767
        %vm2769 = vweird.f32 %v2312
        %vm2770 = vweird.f32 %v2764
        %vm2771 = vmor %vm2769, %vm2770
        %v2772 = vsel %vm2771, %v2764, %v2768
        %v2773 = vand.u32 2147483647, %v2312
        %vm2774 = vcmp.eq.f32.partialorder %v2773, 8.507059e+37
        %v2775 = vand.u32 %v2312, 2147483648
        %v2776 = vor.u32 1.1754944e-38, %v2775
        %v2777 = vsel %vm2774, %v2776, %v2772
        %v2778 = vmul.f32 1.0, %v2777
        %v2779 = vrcp.pop %v2313
        %v2780 = vmul.f32 %v2313, %v2779
        %v2781 = vsub.f32 1.0, %v2780
        %v2782 = vmul.f32 %v2779, %v2781
        %v2783 = vadd.f32 %v2779, %v2782
        %vm2784 = vweird.f32 %v2313
        %vm2785 = vweird.f32 %v2779
        %vm2786 = vmor %vm2784, %vm2785
        %v2787 = vsel %vm2786, %v2779, %v2783
        %v2788 = vand.u32 2147483647, %v2313
        %vm2789 = vcmp.eq.f32.partialorder %v2788, 8.507059e+37
        %v2790 = vand.u32 %v2313, 2147483648
        %v2791 = vor.u32 1.1754944e-38, %v2790
        %v2792 = vsel %vm2789, %v2791, %v2787
        %v2793 = vmul.f32 1.0, %v2792
        %v2794 = vmul.f32 %v2154, %v2328
        %v2795 = vmul.f32 %v2155, %v2343
        %v2796 = vmul.f32 %v2156, %v2358
        %v2797 = vmul.f32 %v2157, %v2373
        %v2798 = vmul.f32 %v2158, %v2388
        %v2799 = vmul.f32 %v2159, %v2403
        %v2800 = vmul.f32 %v2160, %v2418
        %v2801 = vmul.f32 %v2161, %v2433
        %v2802 = vmul.f32 %v2162, %v2448
        %v2803 = vmul.f32 %v2163, %v2463
        %v2804 = vmul.f32 %v2164, %v2478
        %v2805 = vmul.f32 %v2165, %v2493
        %v2806 = vmul.f32 %v2166, %v2508
        %v2807 = vmul.f32 %v2167, %v2523
        %v2808 = vmul.f32 %v2168, %v2538
        %v2809 = vmul.f32 %v2169, %v2553
        %v2810 = vmul.f32 %v2170, %v2568
        %v2811 = vmul.f32 %v2171, %v2583
        %v2812 = vmul.f32 %v2172, %v2598
        %v2813 = vmul.f32 %v2173, %v2613
        %v2814 = vmul.f32 %v2174, %v2628
        %v2815 = vmul.f32 %v2175, %v2643
        %v2816 = vmul.f32 %v2176, %v2658
        %v2817 = vmul.f32 %v2177, %v2673
        %v2818 = vmul.f32 %v2178, %v2688
        %v2819 = vmul.f32 %v2179, %v2703
        %v2820 = vmul.f32 %v2180, %v2718
        %v2821 = vmul.f32 %v2181, %v2733
        %v2822 = vmul.f32 %v2182, %v2748
        %v2823 = vmul.f32 %v2183, %v2763
        %v2824 = vmul.f32 %v2184, %v2778
        %v2825 = vmul.f32 %v2185, %v2793
        %2826 = vst [vmem:[%s239] sm:$0xff] %v2794
        %2827 = vst [vmem:[%s239 + $0x8] sm:$0xff] %v2795
        %2828 = vst [vmem:[%s239 + $0x10] sm:$0xff] %v2796
        %2829 = vst [vmem:[%s239 + $0x18] sm:$0xff] %v2797
        %2830 = vst [vmem:[%s239 + $0x20] sm:$0xff] %v2798
        %2831 = vst [vmem:[%s239 + $0x28] sm:$0xff] %v2799
        %2832 = vst [vmem:[%s239 + $0x30] sm:$0xff] %v2800
        %2833 = vst [vmem:[%s239 + $0x38] sm:$0xff] %v2801
        %2834 = vst [vmem:[%s239 + $0x40] sm:$0xff] %v2802
        %2835 = vst [vmem:[%s239 + $0x48] sm:$0xff] %v2803
        %2836 = vst [vmem:[%s239 + $0x50] sm:$0xff] %v2804
        %2837 = vst [vmem:[%s239 + $0x58] sm:$0xff] %v2805
        %2838 = vst [vmem:[%s239 + $0x60] sm:$0xff] %v2806
        %2839 = vst [vmem:[%s239 + $0x68] sm:$0xff] %v2807
        %2840 = vst [vmem:[%s239 + $0x70] sm:$0xff] %v2808
        %2841 = vst [vmem:[%s239 + $0x78] sm:$0xff] %v2809
        %2842 = vst [vmem:[%s239 + $0x80] sm:$0xff] %v2810
        %2843 = vst [vmem:[%s239 + $0x88] sm:$0xff] %v2811
        %2844 = vst [vmem:[%s239 + $0x90] sm:$0xff] %v2812
        %2845 = vst [vmem:[%s239 + $0x98] sm:$0xff] %v2813
        %2846 = vst [vmem:[%s239 + $0xa0] sm:$0xff] %v2814
        %2847 = vst [vmem:[%s239 + $0xa8] sm:$0xff] %v2815
        %2848 = vst [vmem:[%s239 + $0xb0] sm:$0xff] %v2816
        %2849 = vst [vmem:[%s239 + $0xb8] sm:$0xff] %v2817
        %2850 = vst [vmem:[%s239 + $0xc0] sm:$0xff] %v2818
        %2851 = vst [vmem:[%s239 + $0xc8] sm:$0xff] %v2819
        %2852 = vst [vmem:[%s239 + $0xd0] sm:$0xff] %v2820
        %2853 = vst [vmem:[%s239 + $0xd8] sm:$0xff] %v2821
        %2854 = vst [vmem:[%s239 + $0xe0] sm:$0xff] %v2822
        %2855 = vst [vmem:[%s239 + $0xe8] sm:$0xff] %v2823
        %2856 = vst [vmem:[%s239 + $0xf0] sm:$0xff] %v2824
        %2857 = vst [vmem:[%s239 + $0xf8] sm:$0xff] %v2825
        %s2858 = sand.u32 %s121, 1
        %s2859 = scalar_lea.sflag [#allocation4], %s2858
        %s2860 = sand.u32 %s121, 1
        %s2861 = smul.addr %s2860, 256
        %s2862 = scalar_lea.vmem [#allocation7], %s2861
        // Predicated region
        $region41: #{tpu_custom_call.1} parent=31 // pred_check
          %p2863 = pneg %p131
        $region42: #{tpu_custom_call.1} parent=31 // pred_check_branch
          %2865 = sbr.rel (%p2863) target = $region44
        $region43: #{tpu_custom_call.1} parent=31 // pred_region
          %s2866 = smul.u32 8, %s25
          %2868 = vsyncadd %s2859, 0
          %s2869 = smul.addr %s2866, 4
          %s2870 = sadd.s32 %s26, %s2869
          %s2871 = smul.addr %s2870, 8
          %s2872 = scalar_lea.hbm %s3, %s2871
          %s2873 = sshll.u32 %s2862, 4
          %s2874 = int_to_ptr.vmem [resolvable:$true] %s2873
          %s2875 = sshll.u32 %s2872, 4
          %s2876 = int_to_ptr.hbm [resolvable:$true] %s2875
          %2881 = dma.vmem_to_hbm [thread:$0]  %s2874, 4096, %s2876, %s2859, 128, 128, 8
        $region44: #{tpu_custom_call.1} parent=31 // pred_fallthru
          _
      $region32: #{tpu_custom_call.1} parent=5 // pred_fallthru
        _
      %p2882 = scmp.le.s32.totalorder 2, %s16
      // Predicated region
      $region45: #{tpu_custom_call.1} parent=5 // pred_check
        %p2883 = pneg %p2882
      $region46: #{tpu_custom_call.1} parent=5 // pred_check_branch
        %2885 = sbr.rel (%p2883) target = $region48
      $region47: #{tpu_custom_call.1} parent=5 // pred_region
        %s2886 = ssub.s32 %s16, 2
        // Predicated region
        $region49: #{tpu_custom_call.1} parent=47 // pred_check
          %p2887 = pneg %p137
        $region50: #{tpu_custom_call.1} parent=47 // pred_check_branch
          %2889 = sbr.rel (%p2887) target = $region52
        $region51: #{tpu_custom_call.1} parent=47 // pred_region
          %s2890 = sand.u32 %s122, 1
          %s2891 = scalar_lea.sflag [#allocation4], %s2890
          %s2892 = sand.u32 %s122, 1
          %s2893 = smul.addr %s2892, 256
          %s2894 = scalar_lea.vmem [#allocation7], %s2893
          %2896 = dma.done %s2891, 4096
        $region52: #{tpu_custom_call.1} parent=47 // pred_fallthru
          _
      $region48: #{tpu_custom_call.1} parent=5 // pred_fallthru
        _
    $region6: #{tpu_custom_call.1} parent=1 // loop_footer
      %s20 = sadd.s32 1, %s16
    $region7: #{tpu_custom_call.1} parent=1 // loop_footer_branch
      %15 = sbr.rel target = $region3
    $region8: #{tpu_custom_call.1} parent=1 // loop_exit
      _
    %2897 = vsyncpa [#allocation3], 1
    %s2898 = scalar_lea.sflag [#allocation3], 1
    %2899 = vsyncpa %s2898, 1
    %2900 = vsyncpa [#allocation6], 1
    %2901 = vsyncpa [#allocation4], 1
    %s2902 = scalar_lea.sflag [#allocation4], 1
    %2903 = vsyncpa %s2902, 1

</llo_original>
